<compile_context>
chip_gen: v6e
topology: v6e:2x2x1
jax: 0.10.0
libtpu: 0.0.40
codegen_flags: <defaults>
</compile_context>

<pallas_src>
import jax
import jax.numpy as jnp
from jax.experimental import pallas as pl
from jax.experimental.pallas import tpu as pltpu

BLOCK_SIZE = 8     # max sequence length T (tril buffer size in the PyTorch module)
EMBED_DIM = 64     # C
HEAD_DIM = 16      # H


def _cdiv(a, b):
    return -(-a // b)


def _round_up(n, m):
    return _cdiv(n, m) * m


def _head_kernel(x_ref, wt_ref, o_ref):
    # x_ref : (Bb, T*C)  row-major flatten of the (Bb, T, C) input block
    # wt_ref: (3H, C)    fused projection weight, rows ordered [q | k | v]
    # o_ref : (Bb, T*H)  row-major flatten of the (Bb, T, H) output block
    Bb, TC = x_ref.shape
    three_h, C = wt_ref.shape
    H = three_h // 3
    T = TC // C
    scale = H ** -0.5

    w = wt_ref[...]                                    # (3H, C), MXU dtype (bf16)

    # ---- Put the batch on the lane axis: one 2-D transpose of the block. ----
    # Every subsequent vector op is Bb lanes wide (full 128-lane vregs for
    # large blocks) instead of 8/16-lane-wide per-batch tiles.
    xT = x_ref[...].T                                   # (T*C, Bb), f32

    # ---- Fused Q/K/V projection on the MXU, batch mapped to MXU lanes. -----
    # dot((3H, C), (C, Bb)): contraction depth C, output lanes = Bb.
    q_rows, k_rows, v_rows = [], [], []
    for t in range(T):
        xt = xT[t * C:(t + 1) * C, :].astype(w.dtype)               # (C, Bb)
        qkv_t = jnp.dot(w, xt, preferred_element_type=jnp.float32)  # (3H, Bb) f32
        q_rows.append(qkv_t[0:H, :])
        k_rows.append(qkv_t[H:2 * H, :])
        v_rows.append(qkv_t[2 * H:3 * H, :])

    # ---- Causal attention entirely on VPU/XLU/EUP (no per-batch matmuls). ---
    tk_idx = jax.lax.broadcasted_iota(jnp.int32, (T, 1), 0)  # hoisted out of loop
    out_rows = []
    for tq in range(T):
        q_t = q_rows[tq]                                            # (H, Bb)
        # scores s[tk, b] = scale * <q[:, b], k_tk[:, b]>  (sublane reduce of H)
        s = jnp.concatenate(
            [jnp.sum(q_t * k_rows[tk], axis=0, keepdims=True) for tk in range(T)],
            axis=0) * scale                                         # (T, Bb)
        # causal mask for this (static) query row: keys tk > tq -> -inf
        s = jnp.where(tk_idx <= tq, s, -jnp.inf)
        # numerically stable softmax over the key axis (sublanes), full lane width
        s = s - jnp.max(s, axis=0, keepdims=True)
        p = jnp.exp(s)                                              # (T, Bb)
        denom = jnp.sum(p, axis=0, keepdims=True)                   # (1, Bb)
        p = p * pl.reciprocal(denom, approx=True)                   # EUP slot
        # P @ V: masked keys have exactly zero weight, so only tk <= tq matter.
        o = p[0:1, :] * v_rows[0]                                   # (H, Bb)
        for tk in range(1, tq + 1):
            o = o + p[tk:tk + 1, :] * v_rows[tk]
        out_rows.append(o)

    # ---- Lane-dense store: (T*H, Bb) -> (Bb, T*H)  (T*H = 128 here). -------
    out2d = jnp.concatenate(out_rows, axis=0)                       # (T*H, Bb)
    o_ref[...] = out2d.T.astype(o_ref.dtype)


def fuse_head_weights(wq, wk, wv, *, dtype=jnp.bfloat16):
    """Fuse the three (C, H) projection weights into a single (3H, C) operand.

    Call once outside the hot path.  Row order is [q | k | v].  `dtype`
    controls the MXU input precision (bf16 inputs + f32 accumulation per the
    perf review; pass jnp.float32 for exact-precision matmuls).
    """
    return jnp.concatenate([wq, wk, wv], axis=1).T.astype(dtype)


def head_forward(x, wqkv_t, *, block_b=1024):
    """x: (B, T, C) float; wqkv_t: (3H, C) from fuse_head_weights. Returns (B, T, H).

    Note: callers that can produce x in bf16 upstream halve the dominant HBM
    read; the kernel accepts any float dtype (MXU operands are cast to the
    weight dtype in-kernel).  We deliberately do NOT cast f32 -> bf16 in this
    wrapper, since that would add an un-hidden XLA pass over x.
    """
    B, T, C = x.shape
    three_h, c2 = wqkv_t.shape
    assert c2 == C and three_h % 3 == 0
    H = three_h // 3

    # Batch block size: multiple of 8 (sublane tile).  For large batches keep
    # >= 2 grid steps so v7x can shard the "parallel" axis across both
    # TensorCores (harmless on single-TC v5e/v6e).
    Bb = _round_up(min(block_b, B), 8)
    if B >= 256 and _cdiv(B, Bb) < 2:
        Bb = _round_up(_cdiv(B, 2), 8)
    n_blocks = _cdiv(B, Bb)
    B_pad = n_blocks * Bb

    # Free, row-major flatten: (B, T, C) -> (B, T*C).  Zero-padded batch rows
    # are safe (their softmax rows stay finite) and are sliced away below.
    x2d = x.reshape(B, T * C)
    if B_pad != B:
        x2d = jnp.pad(x2d, ((0, B_pad - B), (0, 0)))

    x_itemsize = jnp.dtype(x.dtype).itemsize
    w_itemsize = jnp.dtype(wqkv_t.dtype).itemsize
    cost = pl.CostEstimate(
        flops=2 * B_pad * T * C * 3 * H + 4 * B_pad * T * T * H,
        transcendentals=B_pad * T * T,
        bytes_accessed=(B_pad * T * C * x_itemsize
                        + 3 * H * C * w_itemsize
                        + B_pad * T * H * x_itemsize),
    )

    out_flat = pl.pallas_call(
        _head_kernel,
        out_shape=jax.ShapeDtypeStruct((B_pad, T * H), x.dtype),
        grid_spec=pltpu.PrefetchScalarGridSpec(
            num_scalar_prefetch=0,
            grid=(n_blocks,),
            in_specs=[
                # TODO(synk): if profiling shows the x DMA exposed after the
                # compute fixes, add pipeline_mode=pl.Buffered(3) here.
                pl.BlockSpec((Bb, T * C), lambda b: (b, 0)),
                # Constant index_map -> fused weight stays resident in VMEM.
                pl.BlockSpec((three_h, C), lambda b: (0, 0)),
            ],
            out_specs=pl.BlockSpec((Bb, T * H), lambda b: (b, 0)),
        ),
        compiler_params=pltpu.CompilerParams(
            dimension_semantics=("parallel",),
            vmem_limit_bytes=32 * 1024 * 1024,
        ),
        cost_estimate=cost,
    )(x2d, wqkv_t)

    return out_flat[:B].reshape(B, T, H)


def reference_forward(x, wk, wq, wv):
    """Plain-JAX reference mirroring the PyTorch module (f32 end-to-end)."""
    k = x @ wk
    q = x @ wq
    v = x @ wv
    wei = (q @ jnp.swapaxes(k, -2, -1)) * (k.shape[-1] ** -0.5)
    T = x.shape[1]
    tril = jnp.tril(jnp.ones((T, T), dtype=bool))
    wei = jnp.where(tril, wei, -jnp.inf)
    wei = jax.nn.softmax(wei, axis=-1)
    return wei @ v


if __name__ == "__main__":
    key = jax.random.PRNGKey(0)
    kx, kk, kq, kv, kx2 = jax.random.split(key, 5)

    B, T = 2, BLOCK_SIZE
    x = jax.random.normal(kx, (B, T, EMBED_DIM), dtype=jnp.float32)

    # Deterministic "Linear(embed_dim, head_dim, bias=False)" weights,
    # stored transposed as (C, H).
    init_scale = EMBED_DIM ** -0.5
    wk = jax.random.uniform(kk, (EMBED_DIM, HEAD_DIM), jnp.float32,
                            -init_scale, init_scale)
    wq = jax.random.uniform(kq, (EMBED_DIM, HEAD_DIM), jnp.float32,
                            -init_scale, init_scale)
    wv = jax.random.uniform(kv, (EMBED_DIM, HEAD_DIM), jnp.float32,
                            -init_scale, init_scale)

    # Fuse (and cast) the projection weights once, outside the hot path.
    wqkv_t = fuse_head_weights(wq, wk, wv)

    # Case 1: small batch (single grid step, block == padded batch).
    out = jax.block_until_ready(head_forward(x, wqkv_t))
    ref = reference_forward(x, wk, wq, wv)
    assert out.shape == (B, T, HEAD_DIM)
    # bf16 MXU operands + approx (EUP) reciprocal -> slightly loose tolerance.
    assert jnp.allclose(out, ref, atol=2e-2, rtol=2e-2), \
        float(jnp.max(jnp.abs(out - ref)))

    # Case 2: larger batch exercising multi-block grid + batch padding.
    B2 = 50
    x2 = jax.random.normal(kx2, (B2, T, EMBED_DIM), dtype=jnp.float32)
    out2 = jax.block_until_ready(head_forward(x2, wqkv_t, block_b=16))
    ref2 = reference_forward(x2, wk, wq, wv)
    assert out2.shape == (B2, T, HEAD_DIM)
    assert jnp.allclose(out2, ref2, atol=2e-2, rtol=2e-2), \
        float(jnp.max(jnp.abs(out2 - ref2)))

    print("KERNEL_OK")
</pallas_src>

<mosaic_0001>
module attributes {stable_mosaic.version = 11 : i64} {
  func.func @_head_kernel(%arg0: i32, %arg1: memref<8x512xf32, #tpu.memory_space<vmem>>, %arg2: memref<48x64xbf16, #tpu.memory_space<vmem>>, %arg3: memref<8x128xf32, #tpu.memory_space<vmem>>) attributes {dimension_semantics = [#tpu.dimension_semantics<parallel>], iteration_bounds = array<i64: 1>, scalar_prefetch = 0 : i64, scratch_operands = 0 : i64, tpu.core_type = #tpu.core_type<tc>, window_params = [{transform_indices = @transform_0, window_bounds = array<i64: 8, 512>}, {pipeline_mode = #tpu.pipeline_mode<synchronous>, transform_indices = @transform_1, window_bounds = array<i64: 48, 64>}, {transform_indices = @transform_2, window_bounds = array<i64: 8, 128>}]} {
    %c0 = arith.constant 0 : index
    %c0_0 = arith.constant 0 : index
    %0 = vector.load %arg2[%c0, %c0_0] : memref<48x64xbf16, #tpu.memory_space<vmem>>, vector<48x64xbf16>
    %c0_1 = arith.constant 0 : index
    %c0_2 = arith.constant 0 : index
    %1 = vector.load %arg1[%c0_1, %c0_2] : memref<8x512xf32, #tpu.memory_space<vmem>>, vector<8x512xf32>
    %2 = tpu.transpose %1, [1, 0] : vector<8x512xf32> -> vector<512x8xf32>
    %3 = vector.extract_strided_slice %2 {offsets = [0, 0], sizes = [64, 8], strides = [1, 1]} : vector<512x8xf32> to vector<64x8xf32>
    %4 = arith.truncf %3 : vector<64x8xf32> to vector<64x8xbf16>
    %cst = arith.constant dense<0.000000e+00> : vector<48x8xf32>
    %5 = tpu.matmul %0, %4, %cst {dimension_numbers = #tpu.dot_dimension_numbers<[1], [0], [0], [1], [0, 0, 1, 1], [], []>} : vector<48x64xbf16>, vector<64x8xbf16>, vector<48x8xf32> -> vector<48x8xf32>
    %6 = vector.extract_strided_slice %5 {offsets = [0, 0], sizes = [16, 8], strides = [1, 1]} : vector<48x8xf32> to vector<16x8xf32>
    %7 = vector.extract_strided_slice %5 {offsets = [16, 0], sizes = [16, 8], strides = [1, 1]} : vector<48x8xf32> to vector<16x8xf32>
    %8 = vector.extract_strided_slice %5 {offsets = [32, 0], sizes = [16, 8], strides = [1, 1]} : vector<48x8xf32> to vector<16x8xf32>
    %9 = vector.extract_strided_slice %2 {offsets = [64, 0], sizes = [64, 8], strides = [1, 1]} : vector<512x8xf32> to vector<64x8xf32>
    %10 = arith.truncf %9 : vector<64x8xf32> to vector<64x8xbf16>
    %cst_3 = arith.constant dense<0.000000e+00> : vector<48x8xf32>
    %11 = tpu.matmul %0, %10, %cst_3 {dimension_numbers = #tpu.dot_dimension_numbers<[1], [0], [0], [1], [0, 0, 1, 1], [], []>} : vector<48x64xbf16>, vector<64x8xbf16>, vector<48x8xf32> -> vector<48x8xf32>
    %12 = vector.extract_strided_slice %11 {offsets = [0, 0], sizes = [16, 8], strides = [1, 1]} : vector<48x8xf32> to vector<16x8xf32>
    %13 = vector.extract_strided_slice %11 {offsets = [16, 0], sizes = [16, 8], strides = [1, 1]} : vector<48x8xf32> to vector<16x8xf32>
    %14 = vector.extract_strided_slice %11 {offsets = [32, 0], sizes = [16, 8], strides = [1, 1]} : vector<48x8xf32> to vector<16x8xf32>
    %15 = vector.extract_strided_slice %2 {offsets = [128, 0], sizes = [64, 8], strides = [1, 1]} : vector<512x8xf32> to vector<64x8xf32>
    %16 = arith.truncf %15 : vector<64x8xf32> to vector<64x8xbf16>
    %cst_4 = arith.constant dense<0.000000e+00> : vector<48x8xf32>
    %17 = tpu.matmul %0, %16, %cst_4 {dimension_numbers = #tpu.dot_dimension_numbers<[1], [0], [0], [1], [0, 0, 1, 1], [], []>} : vector<48x64xbf16>, vector<64x8xbf16>, vector<48x8xf32> -> vector<48x8xf32>
    %18 = vector.extract_strided_slice %17 {offsets = [0, 0], sizes = [16, 8], strides = [1, 1]} : vector<48x8xf32> to vector<16x8xf32>
    %19 = vector.extract_strided_slice %17 {offsets = [16, 0], sizes = [16, 8], strides = [1, 1]} : vector<48x8xf32> to vector<16x8xf32>
    %20 = vector.extract_strided_slice %17 {offsets = [32, 0], sizes = [16, 8], strides = [1, 1]} : vector<48x8xf32> to vector<16x8xf32>
    %21 = vector.extract_strided_slice %2 {offsets = [192, 0], sizes = [64, 8], strides = [1, 1]} : vector<512x8xf32> to vector<64x8xf32>
    %22 = arith.truncf %21 : vector<64x8xf32> to vector<64x8xbf16>
    %cst_5 = arith.constant dense<0.000000e+00> : vector<48x8xf32>
    %23 = tpu.matmul %0, %22, %cst_5 {dimension_numbers = #tpu.dot_dimension_numbers<[1], [0], [0], [1], [0, 0, 1, 1], [], []>} : vector<48x64xbf16>, vector<64x8xbf16>, vector<48x8xf32> -> vector<48x8xf32>
    %24 = vector.extract_strided_slice %23 {offsets = [0, 0], sizes = [16, 8], strides = [1, 1]} : vector<48x8xf32> to vector<16x8xf32>
    %25 = vector.extract_strided_slice %23 {offsets = [16, 0], sizes = [16, 8], strides = [1, 1]} : vector<48x8xf32> to vector<16x8xf32>
    %26 = vector.extract_strided_slice %23 {offsets = [32, 0], sizes = [16, 8], strides = [1, 1]} : vector<48x8xf32> to vector<16x8xf32>
    %27 = vector.extract_strided_slice %2 {offsets = [256, 0], sizes = [64, 8], strides = [1, 1]} : vector<512x8xf32> to vector<64x8xf32>
    %28 = arith.truncf %27 : vector<64x8xf32> to vector<64x8xbf16>
    %cst_6 = arith.constant dense<0.000000e+00> : vector<48x8xf32>
    %29 = tpu.matmul %0, %28, %cst_6 {dimension_numbers = #tpu.dot_dimension_numbers<[1], [0], [0], [1], [0, 0, 1, 1], [], []>} : vector<48x64xbf16>, vector<64x8xbf16>, vector<48x8xf32> -> vector<48x8xf32>
    %30 = vector.extract_strided_slice %29 {offsets = [0, 0], sizes = [16, 8], strides = [1, 1]} : vector<48x8xf32> to vector<16x8xf32>
    %31 = vector.extract_strided_slice %29 {offsets = [16, 0], sizes = [16, 8], strides = [1, 1]} : vector<48x8xf32> to vector<16x8xf32>
    %32 = vector.extract_strided_slice %29 {offsets = [32, 0], sizes = [16, 8], strides = [1, 1]} : vector<48x8xf32> to vector<16x8xf32>
    %33 = vector.extract_strided_slice %2 {offsets = [320, 0], sizes = [64, 8], strides = [1, 1]} : vector<512x8xf32> to vector<64x8xf32>
    %34 = arith.truncf %33 : vector<64x8xf32> to vector<64x8xbf16>
    %cst_7 = arith.constant dense<0.000000e+00> : vector<48x8xf32>
    %35 = tpu.matmul %0, %34, %cst_7 {dimension_numbers = #tpu.dot_dimension_numbers<[1], [0], [0], [1], [0, 0, 1, 1], [], []>} : vector<48x64xbf16>, vector<64x8xbf16>, vector<48x8xf32> -> vector<48x8xf32>
    %36 = vector.extract_strided_slice %35 {offsets = [0, 0], sizes = [16, 8], strides = [1, 1]} : vector<48x8xf32> to vector<16x8xf32>
    %37 = vector.extract_strided_slice %35 {offsets = [16, 0], sizes = [16, 8], strides = [1, 1]} : vector<48x8xf32> to vector<16x8xf32>
    %38 = vector.extract_strided_slice %35 {offsets = [32, 0], sizes = [16, 8], strides = [1, 1]} : vector<48x8xf32> to vector<16x8xf32>
    %39 = vector.extract_strided_slice %2 {offsets = [384, 0], sizes = [64, 8], strides = [1, 1]} : vector<512x8xf32> to vector<64x8xf32>
    %40 = arith.truncf %39 : vector<64x8xf32> to vector<64x8xbf16>
    %cst_8 = arith.constant dense<0.000000e+00> : vector<48x8xf32>
    %41 = tpu.matmul %0, %40, %cst_8 {dimension_numbers = #tpu.dot_dimension_numbers<[1], [0], [0], [1], [0, 0, 1, 1], [], []>} : vector<48x64xbf16>, vector<64x8xbf16>, vector<48x8xf32> -> vector<48x8xf32>
    %42 = vector.extract_strided_slice %41 {offsets = [0, 0], sizes = [16, 8], strides = [1, 1]} : vector<48x8xf32> to vector<16x8xf32>
    %43 = vector.extract_strided_slice %41 {offsets = [16, 0], sizes = [16, 8], strides = [1, 1]} : vector<48x8xf32> to vector<16x8xf32>
    %44 = vector.extract_strided_slice %41 {offsets = [32, 0], sizes = [16, 8], strides = [1, 1]} : vector<48x8xf32> to vector<16x8xf32>
    %45 = vector.extract_strided_slice %2 {offsets = [448, 0], sizes = [64, 8], strides = [1, 1]} : vector<512x8xf32> to vector<64x8xf32>
    %46 = arith.truncf %45 : vector<64x8xf32> to vector<64x8xbf16>
    %cst_9 = arith.constant dense<0.000000e+00> : vector<48x8xf32>
    %47 = tpu.matmul %0, %46, %cst_9 {dimension_numbers = #tpu.dot_dimension_numbers<[1], [0], [0], [1], [0, 0, 1, 1], [], []>} : vector<48x64xbf16>, vector<64x8xbf16>, vector<48x8xf32> -> vector<48x8xf32>
    %48 = vector.extract_strided_slice %47 {offsets = [0, 0], sizes = [16, 8], strides = [1, 1]} : vector<48x8xf32> to vector<16x8xf32>
    %49 = vector.extract_strided_slice %47 {offsets = [16, 0], sizes = [16, 8], strides = [1, 1]} : vector<48x8xf32> to vector<16x8xf32>
    %50 = vector.extract_strided_slice %47 {offsets = [32, 0], sizes = [16, 8], strides = [1, 1]} : vector<48x8xf32> to vector<16x8xf32>
    %51 = tpu.iota {dimensions = array<i32: 0>} : vector<8x1xi32>
    %52 = arith.mulf %6, %7 : vector<16x8xf32>
    %cst_10 = arith.constant dense<0.000000e+00> : vector<8xf32>
    %53 = vector.multi_reduction <add>, %52, %cst_10 [0] : vector<16x8xf32> to vector<8xf32>
    %54 = vector.shape_cast %53 : vector<8xf32> to vector<1x8xf32>
    %55 = arith.mulf %6, %13 : vector<16x8xf32>
    %cst_11 = arith.constant dense<0.000000e+00> : vector<8xf32>
    %56 = vector.multi_reduction <add>, %55, %cst_11 [0] : vector<16x8xf32> to vector<8xf32>
    %57 = vector.shape_cast %56 : vector<8xf32> to vector<1x8xf32>
    %58 = arith.mulf %6, %19 : vector<16x8xf32>
    %cst_12 = arith.constant dense<0.000000e+00> : vector<8xf32>
    %59 = vector.multi_reduction <add>, %58, %cst_12 [0] : vector<16x8xf32> to vector<8xf32>
    %60 = vector.shape_cast %59 : vector<8xf32> to vector<1x8xf32>
    %61 = arith.mulf %6, %25 : vector<16x8xf32>
    %cst_13 = arith.constant dense<0.000000e+00> : vector<8xf32>
    %62 = vector.multi_reduction <add>, %61, %cst_13 [0] : vector<16x8xf32> to vector<8xf32>
    %63 = vector.shape_cast %62 : vector<8xf32> to vector<1x8xf32>
    %64 = arith.mulf %6, %31 : vector<16x8xf32>
    %cst_14 = arith.constant dense<0.000000e+00> : vector<8xf32>
    %65 = vector.multi_reduction <add>, %64, %cst_14 [0] : vector<16x8xf32> to vector<8xf32>
    %66 = vector.shape_cast %65 : vector<8xf32> to vector<1x8xf32>
    %67 = arith.mulf %6, %37 : vector<16x8xf32>
    %cst_15 = arith.constant dense<0.000000e+00> : vector<8xf32>
    %68 = vector.multi_reduction <add>, %67, %cst_15 [0] : vector<16x8xf32> to vector<8xf32>
    %69 = vector.shape_cast %68 : vector<8xf32> to vector<1x8xf32>
    %70 = arith.mulf %6, %43 : vector<16x8xf32>
    %cst_16 = arith.constant dense<0.000000e+00> : vector<8xf32>
    %71 = vector.multi_reduction <add>, %70, %cst_16 [0] : vector<16x8xf32> to vector<8xf32>
    %72 = vector.shape_cast %71 : vector<8xf32> to vector<1x8xf32>
    %73 = arith.mulf %6, %49 : vector<16x8xf32>
    %cst_17 = arith.constant dense<0.000000e+00> : vector<8xf32>
    %74 = vector.multi_reduction <add>, %73, %cst_17 [0] : vector<16x8xf32> to vector<8xf32>
    %75 = vector.shape_cast %74 : vector<8xf32> to vector<1x8xf32>
    %76 = tpu.concatenate %54, %57, %60, %63, %66, %69, %72, %75 in 0 : vector<1x8xf32>, vector<1x8xf32>, vector<1x8xf32>, vector<1x8xf32>, vector<1x8xf32>, vector<1x8xf32>, vector<1x8xf32>, vector<1x8xf32> -> vector<8x8xf32>
    %cst_18 = arith.constant 2.500000e-01 : f32
    %77 = vector.broadcast %cst_18 : f32 to vector<8x8xf32>
    %78 = arith.mulf %76, %77 : vector<8x8xf32>
    %c0_i32 = arith.constant 0 : i32
    %79 = vector.broadcast %c0_i32 : i32 to vector<8x1xi32>
    %80 = arith.cmpi sle, %51, %79 : vector<8x1xi32>
    %cst_19 = arith.constant 0xFF800000 : f32
    %81 = vector.shape_cast %80 : vector<8x1xi1> to vector<8x1xi1>
    %82 = vector.broadcast %81 : vector<8x1xi1> to vector<8x8xi1>
    %83 = vector.broadcast %cst_19 : f32 to vector<8x8xf32>
    %84 = arith.select %82, %78, %83 : vector<8x8xi1>, vector<8x8xf32>
    %cst_20 = arith.constant dense<0xFF800000> : vector<8xf32>
    %85 = vector.multi_reduction <maximumf>, %84, %cst_20 [0] : vector<8x8xf32> to vector<8xf32>
    %86 = vector.shape_cast %85 : vector<8xf32> to vector<1x8xf32>
    %87 = vector.broadcast %86 : vector<1x8xf32> to vector<8x8xf32>
    %88 = arith.subf %84, %87 : vector<8x8xf32>
    %89 = math.exp %88 : vector<8x8xf32>
    %cst_21 = arith.constant dense<0.000000e+00> : vector<8xf32>
    %90 = vector.multi_reduction <add>, %89, %cst_21 [0] : vector<8x8xf32> to vector<8xf32>
    %91 = vector.shape_cast %90 : vector<8xf32> to vector<1x8xf32>
    %92 = tpu.reciprocal %91 {approx = true} : vector<1x8xf32> -> vector<1x8xf32>
    %93 = vector.broadcast %92 : vector<1x8xf32> to vector<8x8xf32>
    %94 = arith.mulf %89, %93 : vector<8x8xf32>
    %95 = vector.extract_strided_slice %94 {offsets = [0, 0], sizes = [1, 8], strides = [1, 1]} : vector<8x8xf32> to vector<1x8xf32>
    %96 = vector.broadcast %95 : vector<1x8xf32> to vector<16x8xf32>
    %97 = arith.mulf %96, %8 : vector<16x8xf32>
    %98 = arith.mulf %12, %7 : vector<16x8xf32>
    %cst_22 = arith.constant dense<0.000000e+00> : vector<8xf32>
    %99 = vector.multi_reduction <add>, %98, %cst_22 [0] : vector<16x8xf32> to vector<8xf32>
    %100 = vector.shape_cast %99 : vector<8xf32> to vector<1x8xf32>
    %101 = arith.mulf %12, %13 : vector<16x8xf32>
    %cst_23 = arith.constant dense<0.000000e+00> : vector<8xf32>
    %102 = vector.multi_reduction <add>, %101, %cst_23 [0] : vector<16x8xf32> to vector<8xf32>
    %103 = vector.shape_cast %102 : vector<8xf32> to vector<1x8xf32>
    %104 = arith.mulf %12, %19 : vector<16x8xf32>
    %cst_24 = arith.constant dense<0.000000e+00> : vector<8xf32>
    %105 = vector.multi_reduction <add>, %104, %cst_24 [0] : vector<16x8xf32> to vector<8xf32>
    %106 = vector.shape_cast %105 : vector<8xf32> to vector<1x8xf32>
    %107 = arith.mulf %12, %25 : vector<16x8xf32>
    %cst_25 = arith.constant dense<0.000000e+00> : vector<8xf32>
    %108 = vector.multi_reduction <add>, %107, %cst_25 [0] : vector<16x8xf32> to vector<8xf32>
    %109 = vector.shape_cast %108 : vector<8xf32> to vector<1x8xf32>
    %110 = arith.mulf %12, %31 : vector<16x8xf32>
    %cst_26 = arith.constant dense<0.000000e+00> : vector<8xf32>
    %111 = vector.multi_reduction <add>, %110, %cst_26 [0] : vector<16x8xf32> to vector<8xf32>
    %112 = vector.shape_cast %111 : vector<8xf32> to vector<1x8xf32>
    %113 = arith.mulf %12, %37 : vector<16x8xf32>
    %cst_27 = arith.constant dense<0.000000e+00> : vector<8xf32>
    %114 = vector.multi_reduction <add>, %113, %cst_27 [0] : vector<16x8xf32> to vector<8xf32>
    %115 = vector.shape_cast %114 : vector<8xf32> to vector<1x8xf32>
    %116 = arith.mulf %12, %43 : vector<16x8xf32>
    %cst_28 = arith.constant dense<0.000000e+00> : vector<8xf32>
    %117 = vector.multi_reduction <add>, %116, %cst_28 [0] : vector<16x8xf32> to vector<8xf32>
    %118 = vector.shape_cast %117 : vector<8xf32> to vector<1x8xf32>
    %119 = arith.mulf %12, %49 : vector<16x8xf32>
    %cst_29 = arith.constant dense<0.000000e+00> : vector<8xf32>
    %120 = vector.multi_reduction <add>, %119, %cst_29 [0] : vector<16x8xf32> to vector<8xf32>
    %121 = vector.shape_cast %120 : vector<8xf32> to vector<1x8xf32>
    %122 = tpu.concatenate %100, %103, %106, %109, %112, %115, %118, %121 in 0 : vector<1x8xf32>, vector<1x8xf32>, vector<1x8xf32>, vector<1x8xf32>, vector<1x8xf32>, vector<1x8xf32>, vector<1x8xf32>, vector<1x8xf32> -> vector<8x8xf32>
    %cst_30 = arith.constant 2.500000e-01 : f32
    %123 = vector.broadcast %cst_30 : f32 to vector<8x8xf32>
    %124 = arith.mulf %122, %123 : vector<8x8xf32>
    %c1_i32 = arith.constant 1 : i32
    %125 = vector.broadcast %c1_i32 : i32 to vector<8x1xi32>
    %126 = arith.cmpi sle, %51, %125 : vector<8x1xi32>
    %cst_31 = arith.constant 0xFF800000 : f32
    %127 = vector.shape_cast %126 : vector<8x1xi1> to vector<8x1xi1>
    %128 = vector.broadcast %127 : vector<8x1xi1> to vector<8x8xi1>
    %129 = vector.broadcast %cst_31 : f32 to vector<8x8xf32>
    %130 = arith.select %128, %124, %129 : vector<8x8xi1>, vector<8x8xf32>
    %cst_32 = arith.constant dense<0xFF800000> : vector<8xf32>
    %131 = vector.multi_reduction <maximumf>, %130, %cst_32 [0] : vector<8x8xf32> to vector<8xf32>
    %132 = vector.shape_cast %131 : vector<8xf32> to vector<1x8xf32>
    %133 = vector.broadcast %132 : vector<1x8xf32> to vector<8x8xf32>
    %134 = arith.subf %130, %133 : vector<8x8xf32>
    %135 = math.exp %134 : vector<8x8xf32>
    %cst_33 = arith.constant dense<0.000000e+00> : vector<8xf32>
    %136 = vector.multi_reduction <add>, %135, %cst_33 [0] : vector<8x8xf32> to vector<8xf32>
    %137 = vector.shape_cast %136 : vector<8xf32> to vector<1x8xf32>
    %138 = tpu.reciprocal %137 {approx = true} : vector<1x8xf32> -> vector<1x8xf32>
    %139 = vector.broadcast %138 : vector<1x8xf32> to vector<8x8xf32>
    %140 = arith.mulf %135, %139 : vector<8x8xf32>
    %141 = vector.extract_strided_slice %140 {offsets = [0, 0], sizes = [1, 8], strides = [1, 1]} : vector<8x8xf32> to vector<1x8xf32>
    %142 = vector.broadcast %141 : vector<1x8xf32> to vector<16x8xf32>
    %143 = arith.mulf %142, %8 : vector<16x8xf32>
    %144 = vector.extract_strided_slice %140 {offsets = [1, 0], sizes = [1, 8], strides = [1, 1]} : vector<8x8xf32> to vector<1x8xf32>
    %145 = vector.broadcast %144 : vector<1x8xf32> to vector<16x8xf32>
    %146 = arith.mulf %145, %14 : vector<16x8xf32>
    %147 = arith.addf %143, %146 : vector<16x8xf32>
    %148 = arith.mulf %18, %7 : vector<16x8xf32>
    %cst_34 = arith.constant dense<0.000000e+00> : vector<8xf32>
    %149 = vector.multi_reduction <add>, %148, %cst_34 [0] : vector<16x8xf32> to vector<8xf32>
    %150 = vector.shape_cast %149 : vector<8xf32> to vector<1x8xf32>
    %151 = arith.mulf %18, %13 : vector<16x8xf32>
    %cst_35 = arith.constant dense<0.000000e+00> : vector<8xf32>
    %152 = vector.multi_reduction <add>, %151, %cst_35 [0] : vector<16x8xf32> to vector<8xf32>
    %153 = vector.shape_cast %152 : vector<8xf32> to vector<1x8xf32>
    %154 = arith.mulf %18, %19 : vector<16x8xf32>
    %cst_36 = arith.constant dense<0.000000e+00> : vector<8xf32>
    %155 = vector.multi_reduction <add>, %154, %cst_36 [0] : vector<16x8xf32> to vector<8xf32>
    %156 = vector.shape_cast %155 : vector<8xf32> to vector<1x8xf32>
    %157 = arith.mulf %18, %25 : vector<16x8xf32>
    %cst_37 = arith.constant dense<0.000000e+00> : vector<8xf32>
    %158 = vector.multi_reduction <add>, %157, %cst_37 [0] : vector<16x8xf32> to vector<8xf32>
    %159 = vector.shape_cast %158 : vector<8xf32> to vector<1x8xf32>
    %160 = arith.mulf %18, %31 : vector<16x8xf32>
    %cst_38 = arith.constant dense<0.000000e+00> : vector<8xf32>
    %161 = vector.multi_reduction <add>, %160, %cst_38 [0] : vector<16x8xf32> to vector<8xf32>
    %162 = vector.shape_cast %161 : vector<8xf32> to vector<1x8xf32>
    %163 = arith.mulf %18, %37 : vector<16x8xf32>
    %cst_39 = arith.constant dense<0.000000e+00> : vector<8xf32>
    %164 = vector.multi_reduction <add>, %163, %cst_39 [0] : vector<16x8xf32> to vector<8xf32>
    %165 = vector.shape_cast %164 : vector<8xf32> to vector<1x8xf32>
    %166 = arith.mulf %18, %43 : vector<16x8xf32>
    %cst_40 = arith.constant dense<0.000000e+00> : vector<8xf32>
    %167 = vector.multi_reduction <add>, %166, %cst_40 [0] : vector<16x8xf32> to vector<8xf32>
    %168 = vector.shape_cast %167 : vector<8xf32> to vector<1x8xf32>
    %169 = arith.mulf %18, %49 : vector<16x8xf32>
    %cst_41 = arith.constant dense<0.000000e+00> : vector<8xf32>
    %170 = vector.multi_reduction <add>, %169, %cst_41 [0] : vector<16x8xf32> to vector<8xf32>
    %171 = vector.shape_cast %170 : vector<8xf32> to vector<1x8xf32>
    %172 = tpu.concatenate %150, %153, %156, %159, %162, %165, %168, %171 in 0 : vector<1x8xf32>, vector<1x8xf32>, vector<1x8xf32>, vector<1x8xf32>, vector<1x8xf32>, vector<1x8xf32>, vector<1x8xf32>, vector<1x8xf32> -> vector<8x8xf32>
    %cst_42 = arith.constant 2.500000e-01 : f32
    %173 = vector.broadcast %cst_42 : f32 to vector<8x8xf32>
    %174 = arith.mulf %172, %173 : vector<8x8xf32>
    %c2_i32 = arith.constant 2 : i32
    %175 = vector.broadcast %c2_i32 : i32 to vector<8x1xi32>
    %176 = arith.cmpi sle, %51, %175 : vector<8x1xi32>
    %cst_43 = arith.constant 0xFF800000 : f32
    %177 = vector.shape_cast %176 : vector<8x1xi1> to vector<8x1xi1>
    %178 = vector.broadcast %177 : vector<8x1xi1> to vector<8x8xi1>
    %179 = vector.broadcast %cst_43 : f32 to vector<8x8xf32>
    %180 = arith.select %178, %174, %179 : vector<8x8xi1>, vector<8x8xf32>
    %cst_44 = arith.constant dense<0xFF800000> : vector<8xf32>
    %181 = vector.multi_reduction <maximumf>, %180, %cst_44 [0] : vector<8x8xf32> to vector<8xf32>
    %182 = vector.shape_cast %181 : vector<8xf32> to vector<1x8xf32>
    %183 = vector.broadcast %182 : vector<1x8xf32> to vector<8x8xf32>
    %184 = arith.subf %180, %183 : vector<8x8xf32>
    %185 = math.exp %184 : vector<8x8xf32>
    %cst_45 = arith.constant dense<0.000000e+00> : vector<8xf32>
    %186 = vector.multi_reduction <add>, %185, %cst_45 [0] : vector<8x8xf32> to vector<8xf32>
    %187 = vector.shape_cast %186 : vector<8xf32> to vector<1x8xf32>
    %188 = tpu.reciprocal %187 {approx = true} : vector<1x8xf32> -> vector<1x8xf32>
    %189 = vector.broadcast %188 : vector<1x8xf32> to vector<8x8xf32>
    %190 = arith.mulf %185, %189 : vector<8x8xf32>
    %191 = vector.extract_strided_slice %190 {offsets = [0, 0], sizes = [1, 8], strides = [1, 1]} : vector<8x8xf32> to vector<1x8xf32>
    %192 = vector.broadcast %191 : vector<1x8xf32> to vector<16x8xf32>
    %193 = arith.mulf %192, %8 : vector<16x8xf32>
    %194 = vector.extract_strided_slice %190 {offsets = [1, 0], sizes = [1, 8], strides = [1, 1]} : vector<8x8xf32> to vector<1x8xf32>
    %195 = vector.broadcast %194 : vector<1x8xf32> to vector<16x8xf32>
    %196 = arith.mulf %195, %14 : vector<16x8xf32>
    %197 = arith.addf %193, %196 : vector<16x8xf32>
    %198 = vector.extract_strided_slice %190 {offsets = [2, 0], sizes = [1, 8], strides = [1, 1]} : vector<8x8xf32> to vector<1x8xf32>
    %199 = vector.broadcast %198 : vector<1x8xf32> to vector<16x8xf32>
    %200 = arith.mulf %199, %20 : vector<16x8xf32>
    %201 = arith.addf %197, %200 : vector<16x8xf32>
    %202 = arith.mulf %24, %7 : vector<16x8xf32>
    %cst_46 = arith.constant dense<0.000000e+00> : vector<8xf32>
    %203 = vector.multi_reduction <add>, %202, %cst_46 [0] : vector<16x8xf32> to vector<8xf32>
    %204 = vector.shape_cast %203 : vector<8xf32> to vector<1x8xf32>
    %205 = arith.mulf %24, %13 : vector<16x8xf32>
    %cst_47 = arith.constant dense<0.000000e+00> : vector<8xf32>
    %206 = vector.multi_reduction <add>, %205, %cst_47 [0] : vector<16x8xf32> to vector<8xf32>
    %207 = vector.shape_cast %206 : vector<8xf32> to vector<1x8xf32>
    %208 = arith.mulf %24, %19 : vector<16x8xf32>
    %cst_48 = arith.constant dense<0.000000e+00> : vector<8xf32>
    %209 = vector.multi_reduction <add>, %208, %cst_48 [0] : vector<16x8xf32> to vector<8xf32>
    %210 = vector.shape_cast %209 : vector<8xf32> to vector<1x8xf32>
    %211 = arith.mulf %24, %25 : vector<16x8xf32>
    %cst_49 = arith.constant dense<0.000000e+00> : vector<8xf32>
    %212 = vector.multi_reduction <add>, %211, %cst_49 [0] : vector<16x8xf32> to vector<8xf32>
    %213 = vector.shape_cast %212 : vector<8xf32> to vector<1x8xf32>
    %214 = arith.mulf %24, %31 : vector<16x8xf32>
    %cst_50 = arith.constant dense<0.000000e+00> : vector<8xf32>
    %215 = vector.multi_reduction <add>, %214, %cst_50 [0] : vector<16x8xf32> to vector<8xf32>
    %216 = vector.shape_cast %215 : vector<8xf32> to vector<1x8xf32>
    %217 = arith.mulf %24, %37 : vector<16x8xf32>
    %cst_51 = arith.constant dense<0.000000e+00> : vector<8xf32>
    %218 = vector.multi_reduction <add>, %217, %cst_51 [0] : vector<16x8xf32> to vector<8xf32>
    %219 = vector.shape_cast %218 : vector<8xf32> to vector<1x8xf32>
    %220 = arith.mulf %24, %43 : vector<16x8xf32>
    %cst_52 = arith.constant dense<0.000000e+00> : vector<8xf32>
    %221 = vector.multi_reduction <add>, %220, %cst_52 [0] : vector<16x8xf32> to vector<8xf32>
    %222 = vector.shape_cast %221 : vector<8xf32> to vector<1x8xf32>
    %223 = arith.mulf %24, %49 : vector<16x8xf32>
    %cst_53 = arith.constant dense<0.000000e+00> : vector<8xf32>
    %224 = vector.multi_reduction <add>, %223, %cst_53 [0] : vector<16x8xf32> to vector<8xf32>
    %225 = vector.shape_cast %224 : vector<8xf32> to vector<1x8xf32>
    %226 = tpu.concatenate %204, %207, %210, %213, %216, %219, %222, %225 in 0 : vector<1x8xf32>, vector<1x8xf32>, vector<1x8xf32>, vector<1x8xf32>, vector<1x8xf32>, vector<1x8xf32>, vector<1x8xf32>, vector<1x8xf32> -> vector<8x8xf32>
    %cst_54 = arith.constant 2.500000e-01 : f32
    %227 = vector.broadcast %cst_54 : f32 to vector<8x8xf32>
    %228 = arith.mulf %226, %227 : vector<8x8xf32>
    %c3_i32 = arith.constant 3 : i32
    %229 = vector.broadcast %c3_i32 : i32 to vector<8x1xi32>
    %230 = arith.cmpi sle, %51, %229 : vector<8x1xi32>
    %cst_55 = arith.constant 0xFF800000 : f32
    %231 = vector.shape_cast %230 : vector<8x1xi1> to vector<8x1xi1>
    %232 = vector.broadcast %231 : vector<8x1xi1> to vector<8x8xi1>
    %233 = vector.broadcast %cst_55 : f32 to vector<8x8xf32>
    %234 = arith.select %232, %228, %233 : vector<8x8xi1>, vector<8x8xf32>
    %cst_56 = arith.constant dense<0xFF800000> : vector<8xf32>
    %235 = vector.multi_reduction <maximumf>, %234, %cst_56 [0] : vector<8x8xf32> to vector<8xf32>
    %236 = vector.shape_cast %235 : vector<8xf32> to vector<1x8xf32>
    %237 = vector.broadcast %236 : vector<1x8xf32> to vector<8x8xf32>
    %238 = arith.subf %234, %237 : vector<8x8xf32>
    %239 = math.exp %238 : vector<8x8xf32>
    %cst_57 = arith.constant dense<0.000000e+00> : vector<8xf32>
    %240 = vector.multi_reduction <add>, %239, %cst_57 [0] : vector<8x8xf32> to vector<8xf32>
    %241 = vector.shape_cast %240 : vector<8xf32> to vector<1x8xf32>
    %242 = tpu.reciprocal %241 {approx = true} : vector<1x8xf32> -> vector<1x8xf32>
    %243 = vector.broadcast %242 : vector<1x8xf32> to vector<8x8xf32>
    %244 = arith.mulf %239, %243 : vector<8x8xf32>
    %245 = vector.extract_strided_slice %244 {offsets = [0, 0], sizes = [1, 8], strides = [1, 1]} : vector<8x8xf32> to vector<1x8xf32>
    %246 = vector.broadcast %245 : vector<1x8xf32> to vector<16x8xf32>
    %247 = arith.mulf %246, %8 : vector<16x8xf32>
    %248 = vector.extract_strided_slice %244 {offsets = [1, 0], sizes = [1, 8], strides = [1, 1]} : vector<8x8xf32> to vector<1x8xf32>
    %249 = vector.broadcast %248 : vector<1x8xf32> to vector<16x8xf32>
    %250 = arith.mulf %249, %14 : vector<16x8xf32>
    %251 = arith.addf %247, %250 : vector<16x8xf32>
    %252 = vector.extract_strided_slice %244 {offsets = [2, 0], sizes = [1, 8], strides = [1, 1]} : vector<8x8xf32> to vector<1x8xf32>
    %253 = vector.broadcast %252 : vector<1x8xf32> to vector<16x8xf32>
    %254 = arith.mulf %253, %20 : vector<16x8xf32>
    %255 = arith.addf %251, %254 : vector<16x8xf32>
    %256 = vector.extract_strided_slice %244 {offsets = [3, 0], sizes = [1, 8], strides = [1, 1]} : vector<8x8xf32> to vector<1x8xf32>
    %257 = vector.broadcast %256 : vector<1x8xf32> to vector<16x8xf32>
    %258 = arith.mulf %257, %26 : vector<16x8xf32>
    %259 = arith.addf %255, %258 : vector<16x8xf32>
    %260 = arith.mulf %30, %7 : vector<16x8xf32>
    %cst_58 = arith.constant dense<0.000000e+00> : vector<8xf32>
    %261 = vector.multi_reduction <add>, %260, %cst_58 [0] : vector<16x8xf32> to vector<8xf32>
    %262 = vector.shape_cast %261 : vector<8xf32> to vector<1x8xf32>
    %263 = arith.mulf %30, %13 : vector<16x8xf32>
    %cst_59 = arith.constant dense<0.000000e+00> : vector<8xf32>
    %264 = vector.multi_reduction <add>, %263, %cst_59 [0] : vector<16x8xf32> to vector<8xf32>
    %265 = vector.shape_cast %264 : vector<8xf32> to vector<1x8xf32>
    %266 = arith.mulf %30, %19 : vector<16x8xf32>
    %cst_60 = arith.constant dense<0.000000e+00> : vector<8xf32>
    %267 = vector.multi_reduction <add>, %266, %cst_60 [0] : vector<16x8xf32> to vector<8xf32>
    %268 = vector.shape_cast %267 : vector<8xf32> to vector<1x8xf32>
    %269 = arith.mulf %30, %25 : vector<16x8xf32>
    %cst_61 = arith.constant dense<0.000000e+00> : vector<8xf32>
    %270 = vector.multi_reduction <add>, %269, %cst_61 [0] : vector<16x8xf32> to vector<8xf32>
    %271 = vector.shape_cast %270 : vector<8xf32> to vector<1x8xf32>
    %272 = arith.mulf %30, %31 : vector<16x8xf32>
    %cst_62 = arith.constant dense<0.000000e+00> : vector<8xf32>
    %273 = vector.multi_reduction <add>, %272, %cst_62 [0] : vector<16x8xf32> to vector<8xf32>
    %274 = vector.shape_cast %273 : vector<8xf32> to vector<1x8xf32>
    %275 = arith.mulf %30, %37 : vector<16x8xf32>
    %cst_63 = arith.constant dense<0.000000e+00> : vector<8xf32>
    %276 = vector.multi_reduction <add>, %275, %cst_63 [0] : vector<16x8xf32> to vector<8xf32>
    %277 = vector.shape_cast %276 : vector<8xf32> to vector<1x8xf32>
    %278 = arith.mulf %30, %43 : vector<16x8xf32>
    %cst_64 = arith.constant dense<0.000000e+00> : vector<8xf32>
    %279 = vector.multi_reduction <add>, %278, %cst_64 [0] : vector<16x8xf32> to vector<8xf32>
    %280 = vector.shape_cast %279 : vector<8xf32> to vector<1x8xf32>
    %281 = arith.mulf %30, %49 : vector<16x8xf32>
    %cst_65 = arith.constant dense<0.000000e+00> : vector<8xf32>
    %282 = vector.multi_reduction <add>, %281, %cst_65 [0] : vector<16x8xf32> to vector<8xf32>
    %283 = vector.shape_cast %282 : vector<8xf32> to vector<1x8xf32>
    %284 = tpu.concatenate %262, %265, %268, %271, %274, %277, %280, %283 in 0 : vector<1x8xf32>, vector<1x8xf32>, vector<1x8xf32>, vector<1x8xf32>, vector<1x8xf32>, vector<1x8xf32>, vector<1x8xf32>, vector<1x8xf32> -> vector<8x8xf32>
    %cst_66 = arith.constant 2.500000e-01 : f32
    %285 = vector.broadcast %cst_66 : f32 to vector<8x8xf32>
    %286 = arith.mulf %284, %285 : vector<8x8xf32>
    %c4_i32 = arith.constant 4 : i32
    %287 = vector.broadcast %c4_i32 : i32 to vector<8x1xi32>
    %288 = arith.cmpi sle, %51, %287 : vector<8x1xi32>
    %cst_67 = arith.constant 0xFF800000 : f32
    %289 = vector.shape_cast %288 : vector<8x1xi1> to vector<8x1xi1>
    %290 = vector.broadcast %289 : vector<8x1xi1> to vector<8x8xi1>
    %291 = vector.broadcast %cst_67 : f32 to vector<8x8xf32>
    %292 = arith.select %290, %286, %291 : vector<8x8xi1>, vector<8x8xf32>
    %cst_68 = arith.constant dense<0xFF800000> : vector<8xf32>
    %293 = vector.multi_reduction <maximumf>, %292, %cst_68 [0] : vector<8x8xf32> to vector<8xf32>
    %294 = vector.shape_cast %293 : vector<8xf32> to vector<1x8xf32>
    %295 = vector.broadcast %294 : vector<1x8xf32> to vector<8x8xf32>
    %296 = arith.subf %292, %295 : vector<8x8xf32>
    %297 = math.exp %296 : vector<8x8xf32>
    %cst_69 = arith.constant dense<0.000000e+00> : vector<8xf32>
    %298 = vector.multi_reduction <add>, %297, %cst_69 [0] : vector<8x8xf32> to vector<8xf32>
    %299 = vector.shape_cast %298 : vector<8xf32> to vector<1x8xf32>
    %300 = tpu.reciprocal %299 {approx = true} : vector<1x8xf32> -> vector<1x8xf32>
    %301 = vector.broadcast %300 : vector<1x8xf32> to vector<8x8xf32>
    %302 = arith.mulf %297, %301 : vector<8x8xf32>
    %303 = vector.extract_strided_slice %302 {offsets = [0, 0], sizes = [1, 8], strides = [1, 1]} : vector<8x8xf32> to vector<1x8xf32>
    %304 = vector.broadcast %303 : vector<1x8xf32> to vector<16x8xf32>
    %305 = arith.mulf %304, %8 : vector<16x8xf32>
    %306 = vector.extract_strided_slice %302 {offsets = [1, 0], sizes = [1, 8], strides = [1, 1]} : vector<8x8xf32> to vector<1x8xf32>
    %307 = vector.broadcast %306 : vector<1x8xf32> to vector<16x8xf32>
    %308 = arith.mulf %307, %14 : vector<16x8xf32>
    %309 = arith.addf %305, %308 : vector<16x8xf32>
    %310 = vector.extract_strided_slice %302 {offsets = [2, 0], sizes = [1, 8], strides = [1, 1]} : vector<8x8xf32> to vector<1x8xf32>
    %311 = vector.broadcast %310 : vector<1x8xf32> to vector<16x8xf32>
    %312 = arith.mulf %311, %20 : vector<16x8xf32>
    %313 = arith.addf %309, %312 : vector<16x8xf32>
    %314 = vector.extract_strided_slice %302 {offsets = [3, 0], sizes = [1, 8], strides = [1, 1]} : vector<8x8xf32> to vector<1x8xf32>
    %315 = vector.broadcast %314 : vector<1x8xf32> to vector<16x8xf32>
    %316 = arith.mulf %315, %26 : vector<16x8xf32>
    %317 = arith.addf %313, %316 : vector<16x8xf32>
    %318 = vector.extract_strided_slice %302 {offsets = [4, 0], sizes = [1, 8], strides = [1, 1]} : vector<8x8xf32> to vector<1x8xf32>
    %319 = vector.broadcast %318 : vector<1x8xf32> to vector<16x8xf32>
    %320 = arith.mulf %319, %32 : vector<16x8xf32>
    %321 = arith.addf %317, %320 : vector<16x8xf32>
    %322 = arith.mulf %36, %7 : vector<16x8xf32>
    %cst_70 = arith.constant dense<0.000000e+00> : vector<8xf32>
    %323 = vector.multi_reduction <add>, %322, %cst_70 [0] : vector<16x8xf32> to vector<8xf32>
    %324 = vector.shape_cast %323 : vector<8xf32> to vector<1x8xf32>
    %325 = arith.mulf %36, %13 : vector<16x8xf32>
    %cst_71 = arith.constant dense<0.000000e+00> : vector<8xf32>
    %326 = vector.multi_reduction <add>, %325, %cst_71 [0] : vector<16x8xf32> to vector<8xf32>
    %327 = vector.shape_cast %326 : vector<8xf32> to vector<1x8xf32>
    %328 = arith.mulf %36, %19 : vector<16x8xf32>
    %cst_72 = arith.constant dense<0.000000e+00> : vector<8xf32>
    %329 = vector.multi_reduction <add>, %328, %cst_72 [0] : vector<16x8xf32> to vector<8xf32>
    %330 = vector.shape_cast %329 : vector<8xf32> to vector<1x8xf32>
    %331 = arith.mulf %36, %25 : vector<16x8xf32>
    %cst_73 = arith.constant dense<0.000000e+00> : vector<8xf32>
    %332 = vector.multi_reduction <add>, %331, %cst_73 [0] : vector<16x8xf32> to vector<8xf32>
    %333 = vector.shape_cast %332 : vector<8xf32> to vector<1x8xf32>
    %334 = arith.mulf %36, %31 : vector<16x8xf32>
    %cst_74 = arith.constant dense<0.000000e+00> : vector<8xf32>
    %335 = vector.multi_reduction <add>, %334, %cst_74 [0] : vector<16x8xf32> to vector<8xf32>
    %336 = vector.shape_cast %335 : vector<8xf32> to vector<1x8xf32>
    %337 = arith.mulf %36, %37 : vector<16x8xf32>
    %cst_75 = arith.constant dense<0.000000e+00> : vector<8xf32>
    %338 = vector.multi_reduction <add>, %337, %cst_75 [0] : vector<16x8xf32> to vector<8xf32>
    %339 = vector.shape_cast %338 : vector<8xf32> to vector<1x8xf32>
    %340 = arith.mulf %36, %43 : vector<16x8xf32>
    %cst_76 = arith.constant dense<0.000000e+00> : vector<8xf32>
    %341 = vector.multi_reduction <add>, %340, %cst_76 [0] : vector<16x8xf32> to vector<8xf32>
    %342 = vector.shape_cast %341 : vector<8xf32> to vector<1x8xf32>
    %343 = arith.mulf %36, %49 : vector<16x8xf32>
    %cst_77 = arith.constant dense<0.000000e+00> : vector<8xf32>
    %344 = vector.multi_reduction <add>, %343, %cst_77 [0] : vector<16x8xf32> to vector<8xf32>
    %345 = vector.shape_cast %344 : vector<8xf32> to vector<1x8xf32>
    %346 = tpu.concatenate %324, %327, %330, %333, %336, %339, %342, %345 in 0 : vector<1x8xf32>, vector<1x8xf32>, vector<1x8xf32>, vector<1x8xf32>, vector<1x8xf32>, vector<1x8xf32>, vector<1x8xf32>, vector<1x8xf32> -> vector<8x8xf32>
    %cst_78 = arith.constant 2.500000e-01 : f32
    %347 = vector.broadcast %cst_78 : f32 to vector<8x8xf32>
    %348 = arith.mulf %346, %347 : vector<8x8xf32>
    %c5_i32 = arith.constant 5 : i32
    %349 = vector.broadcast %c5_i32 : i32 to vector<8x1xi32>
    %350 = arith.cmpi sle, %51, %349 : vector<8x1xi32>
    %cst_79 = arith.constant 0xFF800000 : f32
    %351 = vector.shape_cast %350 : vector<8x1xi1> to vector<8x1xi1>
    %352 = vector.broadcast %351 : vector<8x1xi1> to vector<8x8xi1>
    %353 = vector.broadcast %cst_79 : f32 to vector<8x8xf32>
    %354 = arith.select %352, %348, %353 : vector<8x8xi1>, vector<8x8xf32>
    %cst_80 = arith.constant dense<0xFF800000> : vector<8xf32>
    %355 = vector.multi_reduction <maximumf>, %354, %cst_80 [0] : vector<8x8xf32> to vector<8xf32>
    %356 = vector.shape_cast %355 : vector<8xf32> to vector<1x8xf32>
    %357 = vector.broadcast %356 : vector<1x8xf32> to vector<8x8xf32>
    %358 = arith.subf %354, %357 : vector<8x8xf32>
    %359 = math.exp %358 : vector<8x8xf32>
    %cst_81 = arith.constant dense<0.000000e+00> : vector<8xf32>
    %360 = vector.multi_reduction <add>, %359, %cst_81 [0] : vector<8x8xf32> to vector<8xf32>
    %361 = vector.shape_cast %360 : vector<8xf32> to vector<1x8xf32>
    %362 = tpu.reciprocal %361 {approx = true} : vector<1x8xf32> -> vector<1x8xf32>
    %363 = vector.broadcast %362 : vector<1x8xf32> to vector<8x8xf32>
    %364 = arith.mulf %359, %363 : vector<8x8xf32>
    %365 = vector.extract_strided_slice %364 {offsets = [0, 0], sizes = [1, 8], strides = [1, 1]} : vector<8x8xf32> to vector<1x8xf32>
    %366 = vector.broadcast %365 : vector<1x8xf32> to vector<16x8xf32>
    %367 = arith.mulf %366, %8 : vector<16x8xf32>
    %368 = vector.extract_strided_slice %364 {offsets = [1, 0], sizes = [1, 8], strides = [1, 1]} : vector<8x8xf32> to vector<1x8xf32>
    %369 = vector.broadcast %368 : vector<1x8xf32> to vector<16x8xf32>
    %370 = arith.mulf %369, %14 : vector<16x8xf32>
    %371 = arith.addf %367, %370 : vector<16x8xf32>
    %372 = vector.extract_strided_slice %364 {offsets = [2, 0], sizes = [1, 8], strides = [1, 1]} : vector<8x8xf32> to vector<1x8xf32>
    %373 = vector.broadcast %372 : vector<1x8xf32> to vector<16x8xf32>
    %374 = arith.mulf %373, %20 : vector<16x8xf32>
    %375 = arith.addf %371, %374 : vector<16x8xf32>
    %376 = vector.extract_strided_slice %364 {offsets = [3, 0], sizes = [1, 8], strides = [1, 1]} : vector<8x8xf32> to vector<1x8xf32>
    %377 = vector.broadcast %376 : vector<1x8xf32> to vector<16x8xf32>
    %378 = arith.mulf %377, %26 : vector<16x8xf32>
    %379 = arith.addf %375, %378 : vector<16x8xf32>
    %380 = vector.extract_strided_slice %364 {offsets = [4, 0], sizes = [1, 8], strides = [1, 1]} : vector<8x8xf32> to vector<1x8xf32>
    %381 = vector.broadcast %380 : vector<1x8xf32> to vector<16x8xf32>
    %382 = arith.mulf %381, %32 : vector<16x8xf32>
    %383 = arith.addf %379, %382 : vector<16x8xf32>
    %384 = vector.extract_strided_slice %364 {offsets = [5, 0], sizes = [1, 8], strides = [1, 1]} : vector<8x8xf32> to vector<1x8xf32>
    %385 = vector.broadcast %384 : vector<1x8xf32> to vector<16x8xf32>
    %386 = arith.mulf %385, %38 : vector<16x8xf32>
    %387 = arith.addf %383, %386 : vector<16x8xf32>
    %388 = arith.mulf %42, %7 : vector<16x8xf32>
    %cst_82 = arith.constant dense<0.000000e+00> : vector<8xf32>
    %389 = vector.multi_reduction <add>, %388, %cst_82 [0] : vector<16x8xf32> to vector<8xf32>
    %390 = vector.shape_cast %389 : vector<8xf32> to vector<1x8xf32>
    %391 = arith.mulf %42, %13 : vector<16x8xf32>
    %cst_83 = arith.constant dense<0.000000e+00> : vector<8xf32>
    %392 = vector.multi_reduction <add>, %391, %cst_83 [0] : vector<16x8xf32> to vector<8xf32>
    %393 = vector.shape_cast %392 : vector<8xf32> to vector<1x8xf32>
    %394 = arith.mulf %42, %19 : vector<16x8xf32>
    %cst_84 = arith.constant dense<0.000000e+00> : vector<8xf32>
    %395 = vector.multi_reduction <add>, %394, %cst_84 [0] : vector<16x8xf32> to vector<8xf32>
    %396 = vector.shape_cast %395 : vector<8xf32> to vector<1x8xf32>
    %397 = arith.mulf %42, %25 : vector<16x8xf32>
    %cst_85 = arith.constant dense<0.000000e+00> : vector<8xf32>
    %398 = vector.multi_reduction <add>, %397, %cst_85 [0] : vector<16x8xf32> to vector<8xf32>
    %399 = vector.shape_cast %398 : vector<8xf32> to vector<1x8xf32>
    %400 = arith.mulf %42, %31 : vector<16x8xf32>
    %cst_86 = arith.constant dense<0.000000e+00> : vector<8xf32>
    %401 = vector.multi_reduction <add>, %400, %cst_86 [0] : vector<16x8xf32> to vector<8xf32>
    %402 = vector.shape_cast %401 : vector<8xf32> to vector<1x8xf32>
    %403 = arith.mulf %42, %37 : vector<16x8xf32>
    %cst_87 = arith.constant dense<0.000000e+00> : vector<8xf32>
    %404 = vector.multi_reduction <add>, %403, %cst_87 [0] : vector<16x8xf32> to vector<8xf32>
    %405 = vector.shape_cast %404 : vector<8xf32> to vector<1x8xf32>
    %406 = arith.mulf %42, %43 : vector<16x8xf32>
    %cst_88 = arith.constant dense<0.000000e+00> : vector<8xf32>
    %407 = vector.multi_reduction <add>, %406, %cst_88 [0] : vector<16x8xf32> to vector<8xf32>
    %408 = vector.shape_cast %407 : vector<8xf32> to vector<1x8xf32>
    %409 = arith.mulf %42, %49 : vector<16x8xf32>
    %cst_89 = arith.constant dense<0.000000e+00> : vector<8xf32>
    %410 = vector.multi_reduction <add>, %409, %cst_89 [0] : vector<16x8xf32> to vector<8xf32>
    %411 = vector.shape_cast %410 : vector<8xf32> to vector<1x8xf32>
    %412 = tpu.concatenate %390, %393, %396, %399, %402, %405, %408, %411 in 0 : vector<1x8xf32>, vector<1x8xf32>, vector<1x8xf32>, vector<1x8xf32>, vector<1x8xf32>, vector<1x8xf32>, vector<1x8xf32>, vector<1x8xf32> -> vector<8x8xf32>
    %cst_90 = arith.constant 2.500000e-01 : f32
    %413 = vector.broadcast %cst_90 : f32 to vector<8x8xf32>
    %414 = arith.mulf %412, %413 : vector<8x8xf32>
    %c6_i32 = arith.constant 6 : i32
    %415 = vector.broadcast %c6_i32 : i32 to vector<8x1xi32>
    %416 = arith.cmpi sle, %51, %415 : vector<8x1xi32>
    %cst_91 = arith.constant 0xFF800000 : f32
    %417 = vector.shape_cast %416 : vector<8x1xi1> to vector<8x1xi1>
    %418 = vector.broadcast %417 : vector<8x1xi1> to vector<8x8xi1>
    %419 = vector.broadcast %cst_91 : f32 to vector<8x8xf32>
    %420 = arith.select %418, %414, %419 : vector<8x8xi1>, vector<8x8xf32>
    %cst_92 = arith.constant dense<0xFF800000> : vector<8xf32>
    %421 = vector.multi_reduction <maximumf>, %420, %cst_92 [0] : vector<8x8xf32> to vector<8xf32>
    %422 = vector.shape_cast %421 : vector<8xf32> to vector<1x8xf32>
    %423 = vector.broadcast %422 : vector<1x8xf32> to vector<8x8xf32>
    %424 = arith.subf %420, %423 : vector<8x8xf32>
    %425 = math.exp %424 : vector<8x8xf32>
    %cst_93 = arith.constant dense<0.000000e+00> : vector<8xf32>
    %426 = vector.multi_reduction <add>, %425, %cst_93 [0] : vector<8x8xf32> to vector<8xf32>
    %427 = vector.shape_cast %426 : vector<8xf32> to vector<1x8xf32>
    %428 = tpu.reciprocal %427 {approx = true} : vector<1x8xf32> -> vector<1x8xf32>
    %429 = vector.broadcast %428 : vector<1x8xf32> to vector<8x8xf32>
    %430 = arith.mulf %425, %429 : vector<8x8xf32>
    %431 = vector.extract_strided_slice %430 {offsets = [0, 0], sizes = [1, 8], strides = [1, 1]} : vector<8x8xf32> to vector<1x8xf32>
    %432 = vector.broadcast %431 : vector<1x8xf32> to vector<16x8xf32>
    %433 = arith.mulf %432, %8 : vector<16x8xf32>
    %434 = vector.extract_strided_slice %430 {offsets = [1, 0], sizes = [1, 8], strides = [1, 1]} : vector<8x8xf32> to vector<1x8xf32>
    %435 = vector.broadcast %434 : vector<1x8xf32> to vector<16x8xf32>
    %436 = arith.mulf %435, %14 : vector<16x8xf32>
    %437 = arith.addf %433, %436 : vector<16x8xf32>
    %438 = vector.extract_strided_slice %430 {offsets = [2, 0], sizes = [1, 8], strides = [1, 1]} : vector<8x8xf32> to vector<1x8xf32>
    %439 = vector.broadcast %438 : vector<1x8xf32> to vector<16x8xf32>
    %440 = arith.mulf %439, %20 : vector<16x8xf32>
    %441 = arith.addf %437, %440 : vector<16x8xf32>
    %442 = vector.extract_strided_slice %430 {offsets = [3, 0], sizes = [1, 8], strides = [1, 1]} : vector<8x8xf32> to vector<1x8xf32>
    %443 = vector.broadcast %442 : vector<1x8xf32> to vector<16x8xf32>
    %444 = arith.mulf %443, %26 : vector<16x8xf32>
    %445 = arith.addf %441, %444 : vector<16x8xf32>
    %446 = vector.extract_strided_slice %430 {offsets = [4, 0], sizes = [1, 8], strides = [1, 1]} : vector<8x8xf32> to vector<1x8xf32>
    %447 = vector.broadcast %446 : vector<1x8xf32> to vector<16x8xf32>
    %448 = arith.mulf %447, %32 : vector<16x8xf32>
    %449 = arith.addf %445, %448 : vector<16x8xf32>
    %450 = vector.extract_strided_slice %430 {offsets = [5, 0], sizes = [1, 8], strides = [1, 1]} : vector<8x8xf32> to vector<1x8xf32>
    %451 = vector.broadcast %450 : vector<1x8xf32> to vector<16x8xf32>
    %452 = arith.mulf %451, %38 : vector<16x8xf32>
    %453 = arith.addf %449, %452 : vector<16x8xf32>
    %454 = vector.extract_strided_slice %430 {offsets = [6, 0], sizes = [1, 8], strides = [1, 1]} : vector<8x8xf32> to vector<1x8xf32>
    %455 = vector.broadcast %454 : vector<1x8xf32> to vector<16x8xf32>
    %456 = arith.mulf %455, %44 : vector<16x8xf32>
    %457 = arith.addf %453, %456 : vector<16x8xf32>
    %458 = arith.mulf %48, %7 : vector<16x8xf32>
    %cst_94 = arith.constant dense<0.000000e+00> : vector<8xf32>
    %459 = vector.multi_reduction <add>, %458, %cst_94 [0] : vector<16x8xf32> to vector<8xf32>
    %460 = vector.shape_cast %459 : vector<8xf32> to vector<1x8xf32>
    %461 = arith.mulf %48, %13 : vector<16x8xf32>
    %cst_95 = arith.constant dense<0.000000e+00> : vector<8xf32>
    %462 = vector.multi_reduction <add>, %461, %cst_95 [0] : vector<16x8xf32> to vector<8xf32>
    %463 = vector.shape_cast %462 : vector<8xf32> to vector<1x8xf32>
    %464 = arith.mulf %48, %19 : vector<16x8xf32>
    %cst_96 = arith.constant dense<0.000000e+00> : vector<8xf32>
    %465 = vector.multi_reduction <add>, %464, %cst_96 [0] : vector<16x8xf32> to vector<8xf32>
    %466 = vector.shape_cast %465 : vector<8xf32> to vector<1x8xf32>
    %467 = arith.mulf %48, %25 : vector<16x8xf32>
    %cst_97 = arith.constant dense<0.000000e+00> : vector<8xf32>
    %468 = vector.multi_reduction <add>, %467, %cst_97 [0] : vector<16x8xf32> to vector<8xf32>
    %469 = vector.shape_cast %468 : vector<8xf32> to vector<1x8xf32>
    %470 = arith.mulf %48, %31 : vector<16x8xf32>
    %cst_98 = arith.constant dense<0.000000e+00> : vector<8xf32>
    %471 = vector.multi_reduction <add>, %470, %cst_98 [0] : vector<16x8xf32> to vector<8xf32>
    %472 = vector.shape_cast %471 : vector<8xf32> to vector<1x8xf32>
    %473 = arith.mulf %48, %37 : vector<16x8xf32>
    %cst_99 = arith.constant dense<0.000000e+00> : vector<8xf32>
    %474 = vector.multi_reduction <add>, %473, %cst_99 [0] : vector<16x8xf32> to vector<8xf32>
    %475 = vector.shape_cast %474 : vector<8xf32> to vector<1x8xf32>
    %476 = arith.mulf %48, %43 : vector<16x8xf32>
    %cst_100 = arith.constant dense<0.000000e+00> : vector<8xf32>
    %477 = vector.multi_reduction <add>, %476, %cst_100 [0] : vector<16x8xf32> to vector<8xf32>
    %478 = vector.shape_cast %477 : vector<8xf32> to vector<1x8xf32>
    %479 = arith.mulf %48, %49 : vector<16x8xf32>
    %cst_101 = arith.constant dense<0.000000e+00> : vector<8xf32>
    %480 = vector.multi_reduction <add>, %479, %cst_101 [0] : vector<16x8xf32> to vector<8xf32>
    %481 = vector.shape_cast %480 : vector<8xf32> to vector<1x8xf32>
    %482 = tpu.concatenate %460, %463, %466, %469, %472, %475, %478, %481 in 0 : vector<1x8xf32>, vector<1x8xf32>, vector<1x8xf32>, vector<1x8xf32>, vector<1x8xf32>, vector<1x8xf32>, vector<1x8xf32>, vector<1x8xf32> -> vector<8x8xf32>
    %cst_102 = arith.constant 2.500000e-01 : f32
    %483 = vector.broadcast %cst_102 : f32 to vector<8x8xf32>
    %484 = arith.mulf %482, %483 : vector<8x8xf32>
    %c7_i32 = arith.constant 7 : i32
    %485 = vector.broadcast %c7_i32 : i32 to vector<8x1xi32>
    %486 = arith.cmpi sle, %51, %485 : vector<8x1xi32>
    %cst_103 = arith.constant 0xFF800000 : f32
    %487 = vector.shape_cast %486 : vector<8x1xi1> to vector<8x1xi1>
    %488 = vector.broadcast %487 : vector<8x1xi1> to vector<8x8xi1>
    %489 = vector.broadcast %cst_103 : f32 to vector<8x8xf32>
    %490 = arith.select %488, %484, %489 : vector<8x8xi1>, vector<8x8xf32>
    %cst_104 = arith.constant dense<0xFF800000> : vector<8xf32>
    %491 = vector.multi_reduction <maximumf>, %490, %cst_104 [0] : vector<8x8xf32> to vector<8xf32>
    %492 = vector.shape_cast %491 : vector<8xf32> to vector<1x8xf32>
    %493 = vector.broadcast %492 : vector<1x8xf32> to vector<8x8xf32>
    %494 = arith.subf %490, %493 : vector<8x8xf32>
    %495 = math.exp %494 : vector<8x8xf32>
    %cst_105 = arith.constant dense<0.000000e+00> : vector<8xf32>
    %496 = vector.multi_reduction <add>, %495, %cst_105 [0] : vector<8x8xf32> to vector<8xf32>
    %497 = vector.shape_cast %496 : vector<8xf32> to vector<1x8xf32>
    %498 = tpu.reciprocal %497 {approx = true} : vector<1x8xf32> -> vector<1x8xf32>
    %499 = vector.broadcast %498 : vector<1x8xf32> to vector<8x8xf32>
    %500 = arith.mulf %495, %499 : vector<8x8xf32>
    %501 = vector.extract_strided_slice %500 {offsets = [0, 0], sizes = [1, 8], strides = [1, 1]} : vector<8x8xf32> to vector<1x8xf32>
    %502 = vector.broadcast %501 : vector<1x8xf32> to vector<16x8xf32>
    %503 = arith.mulf %502, %8 : vector<16x8xf32>
    %504 = vector.extract_strided_slice %500 {offsets = [1, 0], sizes = [1, 8], strides = [1, 1]} : vector<8x8xf32> to vector<1x8xf32>
    %505 = vector.broadcast %504 : vector<1x8xf32> to vector<16x8xf32>
    %506 = arith.mulf %505, %14 : vector<16x8xf32>
    %507 = arith.addf %503, %506 : vector<16x8xf32>
    %508 = vector.extract_strided_slice %500 {offsets = [2, 0], sizes = [1, 8], strides = [1, 1]} : vector<8x8xf32> to vector<1x8xf32>
    %509 = vector.broadcast %508 : vector<1x8xf32> to vector<16x8xf32>
    %510 = arith.mulf %509, %20 : vector<16x8xf32>
    %511 = arith.addf %507, %510 : vector<16x8xf32>
    %512 = vector.extract_strided_slice %500 {offsets = [3, 0], sizes = [1, 8], strides = [1, 1]} : vector<8x8xf32> to vector<1x8xf32>
    %513 = vector.broadcast %512 : vector<1x8xf32> to vector<16x8xf32>
    %514 = arith.mulf %513, %26 : vector<16x8xf32>
    %515 = arith.addf %511, %514 : vector<16x8xf32>
    %516 = vector.extract_strided_slice %500 {offsets = [4, 0], sizes = [1, 8], strides = [1, 1]} : vector<8x8xf32> to vector<1x8xf32>
    %517 = vector.broadcast %516 : vector<1x8xf32> to vector<16x8xf32>
    %518 = arith.mulf %517, %32 : vector<16x8xf32>
    %519 = arith.addf %515, %518 : vector<16x8xf32>
    %520 = vector.extract_strided_slice %500 {offsets = [5, 0], sizes = [1, 8], strides = [1, 1]} : vector<8x8xf32> to vector<1x8xf32>
    %521 = vector.broadcast %520 : vector<1x8xf32> to vector<16x8xf32>
    %522 = arith.mulf %521, %38 : vector<16x8xf32>
    %523 = arith.addf %519, %522 : vector<16x8xf32>
    %524 = vector.extract_strided_slice %500 {offsets = [6, 0], sizes = [1, 8], strides = [1, 1]} : vector<8x8xf32> to vector<1x8xf32>
    %525 = vector.broadcast %524 : vector<1x8xf32> to vector<16x8xf32>
    %526 = arith.mulf %525, %44 : vector<16x8xf32>
    %527 = arith.addf %523, %526 : vector<16x8xf32>
    %528 = vector.extract_strided_slice %500 {offsets = [7, 0], sizes = [1, 8], strides = [1, 1]} : vector<8x8xf32> to vector<1x8xf32>
    %529 = vector.broadcast %528 : vector<1x8xf32> to vector<16x8xf32>
    %530 = arith.mulf %529, %50 : vector<16x8xf32>
    %531 = arith.addf %527, %530 : vector<16x8xf32>
    %532 = tpu.concatenate %97, %147, %201, %259, %321, %387, %457, %531 in 0 : vector<16x8xf32>, vector<16x8xf32>, vector<16x8xf32>, vector<16x8xf32>, vector<16x8xf32>, vector<16x8xf32>, vector<16x8xf32>, vector<16x8xf32> -> vector<128x8xf32>
    %533 = tpu.transpose %532, [1, 0] : vector<128x8xf32> -> vector<8x128xf32>
    %c0_106 = arith.constant 0 : index
    %c0_107 = arith.constant 0 : index
    %534 = vector.load %arg3[%c0_106, %c0_107] : memref<8x128xf32, #tpu.memory_space<vmem>>, vector<8x128xf32>
    tpu.vector_store %arg3[%c0_106, %c0_107], %533 {strides = array<i32>} : memref<8x128xf32, #tpu.memory_space<vmem>>, vector<8x128xf32>,
    return
  }
  func.func @transform_0(%arg0: i32) -> (i32, i32) {
    %c0_i32 = arith.constant 0 : i32
    %c0_i32_0 = arith.constant 0 : i32
    return %arg0, %c0_i32 : i32, i32
  }
  func.func @transform_1(%arg0: i32) -> (i32, i32) {
    %c0_i32 = arith.constant 0 : i32
    %c0_i32_0 = arith.constant 0 : i32
    %c0_i32_1 = arith.constant 0 : i32
    return %c0_i32, %c0_i32_0 : i32, i32
  }
  func.func @transform_2(%arg0: i32) -> (i32, i32) {
    %c0_i32 = arith.constant 0 : i32
    %c0_i32_0 = arith.constant 0 : i32
    return %arg0, %c0_i32 : i32, i32
  }
}

</mosaic_0001>

<llo_original>
// kernel: tpu_custom_call.1
$region0: #{tpu_custom_call.1}
  #allocation0 [shape = 'u32[]', space=smem, size = 0x4, offset = 0x4, fixed_abs, tag = 'smem constant byte address 0x4 - core index']
  #allocation1 [shape = 'u32[144,128]{1,0:T(1,128)}', space=vmem, size = 0x12000, scoped, tag = 'internal scratch']
  %s0 = inlined_call_operand.hbm [shape: f32[8,512], index: 0, kind: input, shape index: {}]
  %s1 = inlined_call_operand.hbm [shape: bf16[48,64], index: 1, kind: input, shape index: {}]
  %s2 = inlined_call_operand.hbm [shape: f32[8,128], index: 2, kind: output, shape index: {}]
  %s3 = sld [smem:[#allocation0]]
  $region26: #{tpu_custom_call.1} parent=0
    _
  %s5 = ssub.s32 1, %s3
  %s6 = scalar_select 0, %s5, %s3
  $region1: #{tpu_custom_call.1} parent=0
    #allocation2 [shape = 'u8[16384]{0}', space=vmem, size = 0x4000, scoped, tag = 'input window, operand 0, single buffered']
    #allocation3 [shape = 's32[1]{0}', space=sflag, size = 0x4, scoped, tag = 'scoped memory for tpu_custom_call.1']
    #allocation4 [shape = 's32[1]{0}', space=sflag, size = 0x4, scoped, tag = 'scoped memory for tpu_custom_call.1']
    #allocation5 [shape = 'u8[12288]{0}', space=vmem, size = 0x3000, scoped, tag = 'input window, operand 1, single buffered']
    #allocation6 [shape = 's32[1]{0}', space=sflag, size = 0x4, scoped, tag = 'scoped memory for tpu_custom_call.1']
    #allocation7 [shape = 'u8[4096]{0}', space=vmem, size = 0x1000, scoped, tag = 'output window, operand 0, single buffered']
    %7 = vsyncpa [#allocation3], 0
    %8 = vsyncpa [#allocation6], 0
    %9 = vsyncpa [#allocation4], 0
    // Predicated region
    $region2: #{tpu_custom_call.1} parent=1 // pred_check
      _
    $region3: #{tpu_custom_call.1} parent=1 // pred_check_branch
      %11 = sbr.rel (0) target = $region5
    $region4: #{tpu_custom_call.1} parent=1 // pred_region
      %s13 = ssub.s32 512, 512
      %14 = vsyncadd [#allocation3], %s13
      %s16 = sshll.u32 [#allocation2], 4
      %s17 = int_to_ptr.vmem [resolvable:$true] %s16
      %19 = dma.hbm_to_vmem [thread:$0]  %s0, 512, %s17, [#allocation3]
    $region5: #{tpu_custom_call.1} parent=1 // pred_fallthru
      _
    // Predicated region
    $region6: #{tpu_custom_call.1} parent=1 // pred_check
      _
    $region7: #{tpu_custom_call.1} parent=1 // pred_check_branch
      %21 = sbr.rel (0) target = $region9
    $region8: #{tpu_custom_call.1} parent=1 // pred_region
      %s23 = ssub.s32 384, 384
      %24 = vsyncadd [#allocation6], %s23
      %s25 = sshll.u32 [#allocation5], 4
      %s26 = int_to_ptr.vmem [resolvable:$true] %s25
      %31 = dma.hbm_to_vmem [thread:$0]  %s1, 384, %s26, [#allocation6], 64, 64, 4
    $region9: #{tpu_custom_call.1} parent=1 // pred_fallthru
      _
    // Predicated region
    $region10: #{tpu_custom_call.1} parent=1 // pred_check
      _
    $region11: #{tpu_custom_call.1} parent=1 // pred_check_branch
      %33 = sbr.rel (0) target = $region13
    $region12: #{tpu_custom_call.1} parent=1 // pred_region
      %34 = dma.done [#allocation3], 512
    $region13: #{tpu_custom_call.1} parent=1 // pred_fallthru
      _
    // Predicated region
    $region14: #{tpu_custom_call.1} parent=1 // pred_check
      _
    $region15: #{tpu_custom_call.1} parent=1 // pred_check_branch
      %36 = sbr.rel (0) target = $region17
    $region16: #{tpu_custom_call.1} parent=1 // pred_region
      %37 = dma.done [#allocation6], 384
    $region17: #{tpu_custom_call.1} parent=1 // pred_fallthru
      _
    %v39 = vld [vmem:[#allocation5] sm:$0xf]
    %v40 = vld [vmem:[#allocation5 + $0x4] sm:$0xf]
    %v41 = vld [vmem:[#allocation5 + $0x8] sm:$0xf]
    %v42 = vld [vmem:[#allocation5 + $0xc] sm:$0xf]
    %v43 = vld [vmem:[#allocation5 + $0x10] sm:$0xf]
    %v44 = vld [vmem:[#allocation5 + $0x14] sm:$0xf]
    %v45 = vld [vmem:[#allocation2] sm:$0xff]
    %v46 = vld [vmem:[#allocation2 + $0x8] sm:$0xff]
    %v47 = vld [vmem:[#allocation2 + $0x10] sm:$0xff]
    %v48 = vld [vmem:[#allocation2 + $0x18] sm:$0xff]
    %49 = vxpose.xlu0.b32.start [1/16] %v45, 128
    %50 = vxpose.xlu0.b32.cont [2/16] 0.0, 128
    %51 = vxpose.xlu0.b32.cont [3/16] 0.0, 128
    %52 = vxpose.xlu0.b32.cont [4/16] 0.0, 128
    %53 = vxpose.xlu0.b32.cont [5/16] 0.0, 128
    %54 = vxpose.xlu0.b32.cont [6/16] 0.0, 128
    %55 = vxpose.xlu0.b32.cont [7/16] 0.0, 128
    %56 = vxpose.xlu0.b32.cont [8/16] 0.0, 128
    %57 = vxpose.xlu0.b32.cont [9/16] 0.0, 128
    %58 = vxpose.xlu0.b32.cont [10/16] 0.0, 128
    %59 = vxpose.xlu0.b32.cont [11/16] 0.0, 128
    %60 = vxpose.xlu0.b32.cont [12/16] 0.0, 128
    %61 = vxpose.xlu0.b32.cont [13/16] 0.0, 128
    %62 = vxpose.xlu0.b32.cont [14/16] 0.0, 128
    %63 = vxpose.xlu0.b32.cont [15/16] 0.0, 128
    %64 = vxpose.xlu0.b32.end [16/16] 0.0, 128
    %v65 = vpop.trf.xlu0
    %v66 = vpop.trf.xlu0
    %v67 = vpop.trf.xlu0
    %v68 = vpop.trf.xlu0
    %v69 = vpop.trf.xlu0
    %v70 = vpop.trf.xlu0
    %v71 = vpop.trf.xlu0
    %v72 = vpop.trf.xlu0
    %v73 = vpop.trf.xlu0
    %v74 = vpop.trf.xlu0
    %v75 = vpop.trf.xlu0
    %v76 = vpop.trf.xlu0
    %v77 = vpop.trf.xlu0
    %v78 = vpop.trf.xlu0
    %v79 = vpop.trf.xlu0
    %v80 = vpop.trf.xlu0
    %81 = vxpose.xlu0.b32.start [1/16] %v46, 128
    %82 = vxpose.xlu0.b32.cont [2/16] 0.0, 128
    %83 = vxpose.xlu0.b32.cont [3/16] 0.0, 128
    %84 = vxpose.xlu0.b32.cont [4/16] 0.0, 128
    %85 = vxpose.xlu0.b32.cont [5/16] 0.0, 128
    %86 = vxpose.xlu0.b32.cont [6/16] 0.0, 128
    %87 = vxpose.xlu0.b32.cont [7/16] 0.0, 128
    %88 = vxpose.xlu0.b32.cont [8/16] 0.0, 128
    %89 = vxpose.xlu0.b32.cont [9/16] 0.0, 128
    %90 = vxpose.xlu0.b32.cont [10/16] 0.0, 128
    %91 = vxpose.xlu0.b32.cont [11/16] 0.0, 128
    %92 = vxpose.xlu0.b32.cont [12/16] 0.0, 128
    %93 = vxpose.xlu0.b32.cont [13/16] 0.0, 128
    %94 = vxpose.xlu0.b32.cont [14/16] 0.0, 128
    %95 = vxpose.xlu0.b32.cont [15/16] 0.0, 128
    %96 = vxpose.xlu0.b32.end [16/16] 0.0, 128
    %v97 = vpop.trf.xlu0
    %v98 = vpop.trf.xlu0
    %v99 = vpop.trf.xlu0
    %v100 = vpop.trf.xlu0
    %v101 = vpop.trf.xlu0
    %v102 = vpop.trf.xlu0
    %v103 = vpop.trf.xlu0
    %v104 = vpop.trf.xlu0
    %v105 = vpop.trf.xlu0
    %v106 = vpop.trf.xlu0
    %v107 = vpop.trf.xlu0
    %v108 = vpop.trf.xlu0
    %v109 = vpop.trf.xlu0
    %v110 = vpop.trf.xlu0
    %v111 = vpop.trf.xlu0
    %v112 = vpop.trf.xlu0
    %113 = vxpose.xlu0.b32.start [1/16] %v47, 128
    %114 = vxpose.xlu0.b32.cont [2/16] 0.0, 128
    %115 = vxpose.xlu0.b32.cont [3/16] 0.0, 128
    %116 = vxpose.xlu0.b32.cont [4/16] 0.0, 128
    %117 = vxpose.xlu0.b32.cont [5/16] 0.0, 128
    %118 = vxpose.xlu0.b32.cont [6/16] 0.0, 128
    %119 = vxpose.xlu0.b32.cont [7/16] 0.0, 128
    %120 = vxpose.xlu0.b32.cont [8/16] 0.0, 128
    %121 = vxpose.xlu0.b32.cont [9/16] 0.0, 128
    %122 = vxpose.xlu0.b32.cont [10/16] 0.0, 128
    %123 = vxpose.xlu0.b32.cont [11/16] 0.0, 128
    %124 = vxpose.xlu0.b32.cont [12/16] 0.0, 128
    %125 = vxpose.xlu0.b32.cont [13/16] 0.0, 128
    %126 = vxpose.xlu0.b32.cont [14/16] 0.0, 128
    %127 = vxpose.xlu0.b32.cont [15/16] 0.0, 128
    %128 = vxpose.xlu0.b32.end [16/16] 0.0, 128
    %v129 = vpop.trf.xlu0
    %v130 = vpop.trf.xlu0
    %v131 = vpop.trf.xlu0
    %v132 = vpop.trf.xlu0
    %v133 = vpop.trf.xlu0
    %v134 = vpop.trf.xlu0
    %v135 = vpop.trf.xlu0
    %v136 = vpop.trf.xlu0
    %v137 = vpop.trf.xlu0
    %v138 = vpop.trf.xlu0
    %v139 = vpop.trf.xlu0
    %v140 = vpop.trf.xlu0
    %v141 = vpop.trf.xlu0
    %v142 = vpop.trf.xlu0
    %v143 = vpop.trf.xlu0
    %v144 = vpop.trf.xlu0
    %145 = vxpose.xlu0.b32.start [1/16] %v48, 128
    %146 = vxpose.xlu0.b32.cont [2/16] 0.0, 128
    %147 = vxpose.xlu0.b32.cont [3/16] 0.0, 128
    %148 = vxpose.xlu0.b32.cont [4/16] 0.0, 128
    %149 = vxpose.xlu0.b32.cont [5/16] 0.0, 128
    %150 = vxpose.xlu0.b32.cont [6/16] 0.0, 128
    %151 = vxpose.xlu0.b32.cont [7/16] 0.0, 128
    %152 = vxpose.xlu0.b32.cont [8/16] 0.0, 128
    %153 = vxpose.xlu0.b32.cont [9/16] 0.0, 128
    %154 = vxpose.xlu0.b32.cont [10/16] 0.0, 128
    %155 = vxpose.xlu0.b32.cont [11/16] 0.0, 128
    %156 = vxpose.xlu0.b32.cont [12/16] 0.0, 128
    %157 = vxpose.xlu0.b32.cont [13/16] 0.0, 128
    %158 = vxpose.xlu0.b32.cont [14/16] 0.0, 128
    %159 = vxpose.xlu0.b32.cont [15/16] 0.0, 128
    %160 = vxpose.xlu0.b32.end [16/16] 0.0, 128
    %v161 = vpop.trf.xlu0
    %v162 = vpop.trf.xlu0
    %v163 = vpop.trf.xlu0
    %v164 = vpop.trf.xlu0
    %v165 = vpop.trf.xlu0
    %v166 = vpop.trf.xlu0
    %v167 = vpop.trf.xlu0
    %v168 = vpop.trf.xlu0
    %v169 = vpop.trf.xlu0
    %v170 = vpop.trf.xlu0
    %v171 = vpop.trf.xlu0
    %v172 = vpop.trf.xlu0
    %v173 = vpop.trf.xlu0
    %v174 = vpop.trf.xlu0
    %v175 = vpop.trf.xlu0
    %v176 = vpop.trf.xlu0
    %v177 = vpack.c.bf16 %v66, %v65
    %v178 = vpack.c.bf16 %v68, %v67
    %v179 = vpack.c.bf16 %v70, %v69
    %v180 = vpack.c.bf16 %v72, %v71
    %v187 = vunpack.c.l.b16 %v39
    %v188 = vunpack.c.l.b16 %v40
    %v189 = vunpack.c.l.b16 %v41
    %v190 = vunpack.c.l.b16 %v42
    %v191 = vunpack.c.l.b16 %v43
    %v192 = vunpack.c.l.b16 %v44
    %v193 = vpack.c.b16 %v188, %v187
    %v194 = vpack.c.b16 %v190, %v189
    %v195 = vpack.c.b16 %v192, %v191
    %vm196 = vcmask 523264
    %v198 = vsel %vm196, %v193, 0
    %v201 = vsel %vm196, %v194, 0
    %v204 = vsel %vm196, %v195, 0
    %206 = vmatprep.subr.bf16.mxu0 0
    %207 = vmatpush1.bf16.msra.mxu0 0
    %208 = vmatprep.subr.bf16.mxu0 0
    %209 = vmatpush1.bf16.msra.mxu0 0
    %210 = vmatprep.subr.bf16.mxu0 0
    %211 = vmatpush1.bf16.msra.mxu0 0
    %212 = vmatprep.subr.bf16.mxu0 0
    %213 = vmatpush1.bf16.msra.mxu0 0
    %214 = vmatprep.subr.bf16.mxu0 0
    %215 = vmatpush1.bf16.msra.mxu0 %v180
    %216 = vmatprep.subr.bf16.mxu0 0
    %217 = vmatpush1.bf16.msra.mxu0 %v179
    %218 = vmatprep.subr.bf16.mxu0 0
    %219 = vmatpush1.bf16.msra.mxu0 %v178
    %220 = vmatprep.subr.bf16.mxu0 0
    %221 = vmatpush1.bf16.msra.mxu0 %v177
    %222 = vmatprep.subr.bf16.mxu0 0
    %223 = vmatpush2.bf16.msra.mxu0 0
    %224 = vmatprep.subr.bf16.mxu0 0
    %225 = vmatpush2.bf16.msra.mxu0 0
    %226 = vmatprep.subr.bf16.mxu0 0
    %227 = vmatpush2.bf16.msra.mxu0 0
    %228 = vmatprep.subr.bf16.mxu0 0
    %229 = vmatpush2.bf16.msra.mxu0 0
    %230 = vmatprep.subr.bf16.mxu0 0
    %231 = vmatpush2.bf16.msra.mxu0 0
    %232 = vmatprep.subr.bf16.mxu0 0
    %233 = vmatpush2.bf16.msra.mxu0 0
    %234 = vmatprep.subr.bf16.mxu0 0
    %235 = vmatpush2.bf16.msra.mxu0 0
    %236 = vmatprep.subr.bf16.mxu0 0
    %237 = vmatpush2.bf16.msra.mxu0 0
    %238 = vmatprep.mubr.bf16.mxu0 0
    %239 = vmatmul.mubr.bf16.gmra.mxu0 %v198
    %v240 = vpop.f32.mrf.mxu0
    %v241 = vadd.f32 0.0, %v240
    %v242 = vpop.f32.mrf.mxu0
    %v243 = vpop.f32.mrf.mxu0
    %v244 = vadd.f32 0.0, %v243
    %v245 = vpop.f32.mrf.mxu0
    %246 = vmatprep.mubr.bf16.mxu0 0
    %247 = vmatmul.mubr.bf16.gmra.mxu0 %v201
    %v248 = vpop.f32.mrf.mxu0
    %v249 = vadd.f32 0.0, %v248
    %v250 = vpop.f32.mrf.mxu0
    %v251 = vpop.f32.mrf.mxu0
    %v252 = vadd.f32 0.0, %v251
    %v253 = vpop.f32.mrf.mxu0
    %254 = vmatprep.mubr.bf16.mxu0 0
    %255 = vmatmul.mubr.bf16.gmra.mxu0 %v204
    %v256 = vpop.f32.mrf.mxu0
    %v257 = vadd.f32 0.0, %v256
    %v258 = vpop.f32.mrf.mxu0
    %v259 = vpop.f32.mrf.mxu0
    %v260 = vadd.f32 0.0, %v259
    %v261 = vpop.f32.mrf.mxu0
    %262 = vdwg.mxu0
    %v263 = vpack.c.bf16 %v74, %v73
    %v264 = vpack.c.bf16 %v76, %v75
    %v265 = vpack.c.bf16 %v78, %v77
    %v266 = vpack.c.bf16 %v80, %v79
    %267 = vmatprep.subr.bf16.mxu0 0
    %268 = vmatpush1.bf16.msra.mxu0 0
    %269 = vmatprep.subr.bf16.mxu0 0
    %270 = vmatpush1.bf16.msra.mxu0 0
    %271 = vmatprep.subr.bf16.mxu0 0
    %272 = vmatpush1.bf16.msra.mxu0 0
    %273 = vmatprep.subr.bf16.mxu0 0
    %274 = vmatpush1.bf16.msra.mxu0 0
    %275 = vmatprep.subr.bf16.mxu0 0
    %276 = vmatpush1.bf16.msra.mxu0 %v266
    %277 = vmatprep.subr.bf16.mxu0 0
    %278 = vmatpush1.bf16.msra.mxu0 %v265
    %279 = vmatprep.subr.bf16.mxu0 0
    %280 = vmatpush1.bf16.msra.mxu0 %v264
    %281 = vmatprep.subr.bf16.mxu0 0
    %282 = vmatpush1.bf16.msra.mxu0 %v263
    %283 = vmatprep.subr.bf16.mxu0 0
    %284 = vmatpush2.bf16.msra.mxu0 0
    %285 = vmatprep.subr.bf16.mxu0 0
    %286 = vmatpush2.bf16.msra.mxu0 0
    %287 = vmatprep.subr.bf16.mxu0 0
    %288 = vmatpush2.bf16.msra.mxu0 0
    %289 = vmatprep.subr.bf16.mxu0 0
    %290 = vmatpush2.bf16.msra.mxu0 0
    %291 = vmatprep.subr.bf16.mxu0 0
    %292 = vmatpush2.bf16.msra.mxu0 0
    %293 = vmatprep.subr.bf16.mxu0 0
    %294 = vmatpush2.bf16.msra.mxu0 0
    %295 = vmatprep.subr.bf16.mxu0 0
    %296 = vmatpush2.bf16.msra.mxu0 0
    %297 = vmatprep.subr.bf16.mxu0 0
    %298 = vmatpush2.bf16.msra.mxu0 0
    %299 = vmatprep.mubr.bf16.mxu0 0
    %300 = vmatmul.mubr.bf16.gmra.mxu0 %v198
    %v301 = vpop.f32.mrf.mxu0
    %v302 = vadd.f32 0.0, %v301
    %v303 = vpop.f32.mrf.mxu0
    %v304 = vpop.f32.mrf.mxu0
    %v305 = vadd.f32 0.0, %v304
    %v306 = vpop.f32.mrf.mxu0
    %307 = vmatprep.mubr.bf16.mxu0 0
    %308 = vmatmul.mubr.bf16.gmra.mxu0 %v201
    %v309 = vpop.f32.mrf.mxu0
    %v310 = vadd.f32 0.0, %v309
    %v311 = vpop.f32.mrf.mxu0
    %v312 = vpop.f32.mrf.mxu0
    %v313 = vadd.f32 0.0, %v312
    %v314 = vpop.f32.mrf.mxu0
    %315 = vmatprep.mubr.bf16.mxu0 0
    %316 = vmatmul.mubr.bf16.gmra.mxu0 %v204
    %v317 = vpop.f32.mrf.mxu0
    %v318 = vadd.f32 0.0, %v317
    %v319 = vpop.f32.mrf.mxu0
    %v320 = vpop.f32.mrf.mxu0
    %v321 = vadd.f32 0.0, %v320
    %v322 = vpop.f32.mrf.mxu0
    %323 = vdwg.mxu0
    %v324 = vpack.c.bf16 %v98, %v97
    %v325 = vpack.c.bf16 %v100, %v99
    %v326 = vpack.c.bf16 %v102, %v101
    %v327 = vpack.c.bf16 %v104, %v103
    %328 = vmatprep.subr.bf16.mxu0 0
    %329 = vmatpush1.bf16.msra.mxu0 0
    %330 = vmatprep.subr.bf16.mxu0 0
    %331 = vmatpush1.bf16.msra.mxu0 0
    %332 = vmatprep.subr.bf16.mxu0 0
    %333 = vmatpush1.bf16.msra.mxu0 0
    %334 = vmatprep.subr.bf16.mxu0 0
    %335 = vmatpush1.bf16.msra.mxu0 0
    %336 = vmatprep.subr.bf16.mxu0 0
    %337 = vmatpush1.bf16.msra.mxu0 %v327
    %338 = vmatprep.subr.bf16.mxu0 0
    %339 = vmatpush1.bf16.msra.mxu0 %v326
    %340 = vmatprep.subr.bf16.mxu0 0
    %341 = vmatpush1.bf16.msra.mxu0 %v325
    %342 = vmatprep.subr.bf16.mxu0 0
    %343 = vmatpush1.bf16.msra.mxu0 %v324
    %344 = vmatprep.subr.bf16.mxu0 0
    %345 = vmatpush2.bf16.msra.mxu0 0
    %346 = vmatprep.subr.bf16.mxu0 0
    %347 = vmatpush2.bf16.msra.mxu0 0
    %348 = vmatprep.subr.bf16.mxu0 0
    %349 = vmatpush2.bf16.msra.mxu0 0
    %350 = vmatprep.subr.bf16.mxu0 0
    %351 = vmatpush2.bf16.msra.mxu0 0
    %352 = vmatprep.subr.bf16.mxu0 0
    %353 = vmatpush2.bf16.msra.mxu0 0
    %354 = vmatprep.subr.bf16.mxu0 0
    %355 = vmatpush2.bf16.msra.mxu0 0
    %356 = vmatprep.subr.bf16.mxu0 0
    %357 = vmatpush2.bf16.msra.mxu0 0
    %358 = vmatprep.subr.bf16.mxu0 0
    %359 = vmatpush2.bf16.msra.mxu0 0
    %360 = vmatprep.mubr.bf16.mxu0 0
    %361 = vmatmul.mubr.bf16.gmra.mxu0 %v198
    %v362 = vpop.f32.mrf.mxu0
    %v363 = vadd.f32 0.0, %v362
    %v364 = vpop.f32.mrf.mxu0
    %v365 = vpop.f32.mrf.mxu0
    %v366 = vadd.f32 0.0, %v365
    %v367 = vpop.f32.mrf.mxu0
    %368 = vmatprep.mubr.bf16.mxu0 0
    %369 = vmatmul.mubr.bf16.gmra.mxu0 %v201
    %v370 = vpop.f32.mrf.mxu0
    %v371 = vadd.f32 0.0, %v370
    %v372 = vpop.f32.mrf.mxu0
    %v373 = vpop.f32.mrf.mxu0
    %v374 = vadd.f32 0.0, %v373
    %v375 = vpop.f32.mrf.mxu0
    %376 = vmatprep.mubr.bf16.mxu0 0
    %377 = vmatmul.mubr.bf16.gmra.mxu0 %v204
    %v378 = vpop.f32.mrf.mxu0
    %v379 = vadd.f32 0.0, %v378
    %v380 = vpop.f32.mrf.mxu0
    %v381 = vpop.f32.mrf.mxu0
    %v382 = vadd.f32 0.0, %v381
    %v383 = vpop.f32.mrf.mxu0
    %384 = vdwg.mxu0
    %v385 = vpack.c.bf16 %v106, %v105
    %v386 = vpack.c.bf16 %v108, %v107
    %v387 = vpack.c.bf16 %v110, %v109
    %v388 = vpack.c.bf16 %v112, %v111
    %389 = vmatprep.subr.bf16.mxu0 0
    %390 = vmatpush1.bf16.msra.mxu0 0
    %391 = vmatprep.subr.bf16.mxu0 0
    %392 = vmatpush1.bf16.msra.mxu0 0
    %393 = vmatprep.subr.bf16.mxu0 0
    %394 = vmatpush1.bf16.msra.mxu0 0
    %395 = vmatprep.subr.bf16.mxu0 0
    %396 = vmatpush1.bf16.msra.mxu0 0
    %397 = vmatprep.subr.bf16.mxu0 0
    %398 = vmatpush1.bf16.msra.mxu0 %v388
    %399 = vmatprep.subr.bf16.mxu0 0
    %400 = vmatpush1.bf16.msra.mxu0 %v387
    %401 = vmatprep.subr.bf16.mxu0 0
    %402 = vmatpush1.bf16.msra.mxu0 %v386
    %403 = vmatprep.subr.bf16.mxu0 0
    %404 = vmatpush1.bf16.msra.mxu0 %v385
    %405 = vmatprep.subr.bf16.mxu0 0
    %406 = vmatpush2.bf16.msra.mxu0 0
    %407 = vmatprep.subr.bf16.mxu0 0
    %408 = vmatpush2.bf16.msra.mxu0 0
    %409 = vmatprep.subr.bf16.mxu0 0
    %410 = vmatpush2.bf16.msra.mxu0 0
    %411 = vmatprep.subr.bf16.mxu0 0
    %412 = vmatpush2.bf16.msra.mxu0 0
    %413 = vmatprep.subr.bf16.mxu0 0
    %414 = vmatpush2.bf16.msra.mxu0 0
    %415 = vmatprep.subr.bf16.mxu0 0
    %416 = vmatpush2.bf16.msra.mxu0 0
    %417 = vmatprep.subr.bf16.mxu0 0
    %418 = vmatpush2.bf16.msra.mxu0 0
    %419 = vmatprep.subr.bf16.mxu0 0
    %420 = vmatpush2.bf16.msra.mxu0 0
    %421 = vmatprep.mubr.bf16.mxu0 0
    %422 = vmatmul.mubr.bf16.gmra.mxu0 %v198
    %v423 = vpop.f32.mrf.mxu0
    %v424 = vadd.f32 0.0, %v423
    %v425 = vpop.f32.mrf.mxu0
    %v426 = vpop.f32.mrf.mxu0
    %v427 = vadd.f32 0.0, %v426
    %v428 = vpop.f32.mrf.mxu0
    %429 = vmatprep.mubr.bf16.mxu0 0
    %430 = vmatmul.mubr.bf16.gmra.mxu0 %v201
    %v431 = vpop.f32.mrf.mxu0
    %v432 = vadd.f32 0.0, %v431
    %v433 = vpop.f32.mrf.mxu0
    %v434 = vpop.f32.mrf.mxu0
    %v435 = vadd.f32 0.0, %v434
    %v436 = vpop.f32.mrf.mxu0
    %437 = vmatprep.mubr.bf16.mxu0 0
    %438 = vmatmul.mubr.bf16.gmra.mxu0 %v204
    %v439 = vpop.f32.mrf.mxu0
    %v440 = vadd.f32 0.0, %v439
    %v441 = vpop.f32.mrf.mxu0
    %v442 = vpop.f32.mrf.mxu0
    %v443 = vadd.f32 0.0, %v442
    %v444 = vpop.f32.mrf.mxu0
    %445 = vdwg.mxu0
    %v446 = vpack.c.bf16 %v130, %v129
    %v447 = vpack.c.bf16 %v132, %v131
    %v448 = vpack.c.bf16 %v134, %v133
    %v449 = vpack.c.bf16 %v136, %v135
    %450 = vmatprep.subr.bf16.mxu0 0
    %451 = vmatpush1.bf16.msra.mxu0 0
    %452 = vmatprep.subr.bf16.mxu0 0
    %453 = vmatpush1.bf16.msra.mxu0 0
    %454 = vmatprep.subr.bf16.mxu0 0
    %455 = vmatpush1.bf16.msra.mxu0 0
    %456 = vmatprep.subr.bf16.mxu0 0
    %457 = vmatpush1.bf16.msra.mxu0 0
    %458 = vmatprep.subr.bf16.mxu0 0
    %459 = vmatpush1.bf16.msra.mxu0 %v449
    %460 = vmatprep.subr.bf16.mxu0 0
    %461 = vmatpush1.bf16.msra.mxu0 %v448
    %462 = vmatprep.subr.bf16.mxu0 0
    %463 = vmatpush1.bf16.msra.mxu0 %v447
    %464 = vmatprep.subr.bf16.mxu0 0
    %465 = vmatpush1.bf16.msra.mxu0 %v446
    %466 = vmatprep.subr.bf16.mxu0 0
    %467 = vmatpush2.bf16.msra.mxu0 0
    %468 = vmatprep.subr.bf16.mxu0 0
    %469 = vmatpush2.bf16.msra.mxu0 0
    %470 = vmatprep.subr.bf16.mxu0 0
    %471 = vmatpush2.bf16.msra.mxu0 0
    %472 = vmatprep.subr.bf16.mxu0 0
    %473 = vmatpush2.bf16.msra.mxu0 0
    %474 = vmatprep.subr.bf16.mxu0 0
    %475 = vmatpush2.bf16.msra.mxu0 0
    %476 = vmatprep.subr.bf16.mxu0 0
    %477 = vmatpush2.bf16.msra.mxu0 0
    %478 = vmatprep.subr.bf16.mxu0 0
    %479 = vmatpush2.bf16.msra.mxu0 0
    %480 = vmatprep.subr.bf16.mxu0 0
    %481 = vmatpush2.bf16.msra.mxu0 0
    %482 = vmatprep.mubr.bf16.mxu0 0
    %483 = vmatmul.mubr.bf16.gmra.mxu0 %v198
    %v484 = vpop.f32.mrf.mxu0
    %v485 = vadd.f32 0.0, %v484
    %v486 = vpop.f32.mrf.mxu0
    %v487 = vpop.f32.mrf.mxu0
    %v488 = vadd.f32 0.0, %v487
    %v489 = vpop.f32.mrf.mxu0
    %490 = vmatprep.mubr.bf16.mxu0 0
    %491 = vmatmul.mubr.bf16.gmra.mxu0 %v201
    %v492 = vpop.f32.mrf.mxu0
    %v493 = vadd.f32 0.0, %v492
    %v494 = vpop.f32.mrf.mxu0
    %v495 = vpop.f32.mrf.mxu0
    %v496 = vadd.f32 0.0, %v495
    %v497 = vpop.f32.mrf.mxu0
    %498 = vmatprep.mubr.bf16.mxu0 0
    %499 = vmatmul.mubr.bf16.gmra.mxu0 %v204
    %v500 = vpop.f32.mrf.mxu0
    %v501 = vadd.f32 0.0, %v500
    %v502 = vpop.f32.mrf.mxu0
    %v503 = vpop.f32.mrf.mxu0
    %v504 = vadd.f32 0.0, %v503
    %v505 = vpop.f32.mrf.mxu0
    %506 = vdwg.mxu0
    %v507 = vpack.c.bf16 %v138, %v137
    %v508 = vpack.c.bf16 %v140, %v139
    %v509 = vpack.c.bf16 %v142, %v141
    %v510 = vpack.c.bf16 %v144, %v143
    %511 = vmatprep.subr.bf16.mxu0 0
    %512 = vmatpush1.bf16.msra.mxu0 0
    %513 = vmatprep.subr.bf16.mxu0 0
    %514 = vmatpush1.bf16.msra.mxu0 0
    %515 = vmatprep.subr.bf16.mxu0 0
    %516 = vmatpush1.bf16.msra.mxu0 0
    %517 = vmatprep.subr.bf16.mxu0 0
    %518 = vmatpush1.bf16.msra.mxu0 0
    %519 = vmatprep.subr.bf16.mxu0 0
    %520 = vmatpush1.bf16.msra.mxu0 %v510
    %521 = vmatprep.subr.bf16.mxu0 0
    %522 = vmatpush1.bf16.msra.mxu0 %v509
    %523 = vmatprep.subr.bf16.mxu0 0
    %524 = vmatpush1.bf16.msra.mxu0 %v508
    %525 = vmatprep.subr.bf16.mxu0 0
    %526 = vmatpush1.bf16.msra.mxu0 %v507
    %527 = vmatprep.subr.bf16.mxu0 0
    %528 = vmatpush2.bf16.msra.mxu0 0
    %529 = vmatprep.subr.bf16.mxu0 0
    %530 = vmatpush2.bf16.msra.mxu0 0
    %531 = vmatprep.subr.bf16.mxu0 0
    %532 = vmatpush2.bf16.msra.mxu0 0
    %533 = vmatprep.subr.bf16.mxu0 0
    %534 = vmatpush2.bf16.msra.mxu0 0
    %535 = vmatprep.subr.bf16.mxu0 0
    %536 = vmatpush2.bf16.msra.mxu0 0
    %537 = vmatprep.subr.bf16.mxu0 0
    %538 = vmatpush2.bf16.msra.mxu0 0
    %539 = vmatprep.subr.bf16.mxu0 0
    %540 = vmatpush2.bf16.msra.mxu0 0
    %541 = vmatprep.subr.bf16.mxu0 0
    %542 = vmatpush2.bf16.msra.mxu0 0
    %543 = vmatprep.mubr.bf16.mxu0 0
    %544 = vmatmul.mubr.bf16.gmra.mxu0 %v198
    %v545 = vpop.f32.mrf.mxu0
    %v546 = vadd.f32 0.0, %v545
    %v547 = vpop.f32.mrf.mxu0
    %v548 = vpop.f32.mrf.mxu0
    %v549 = vadd.f32 0.0, %v548
    %v550 = vpop.f32.mrf.mxu0
    %551 = vmatprep.mubr.bf16.mxu0 0
    %552 = vmatmul.mubr.bf16.gmra.mxu0 %v201
    %v553 = vpop.f32.mrf.mxu0
    %v554 = vadd.f32 0.0, %v553
    %v555 = vpop.f32.mrf.mxu0
    %v556 = vpop.f32.mrf.mxu0
    %v557 = vadd.f32 0.0, %v556
    %v558 = vpop.f32.mrf.mxu0
    %559 = vmatprep.mubr.bf16.mxu0 0
    %560 = vmatmul.mubr.bf16.gmra.mxu0 %v204
    %v561 = vpop.f32.mrf.mxu0
    %v562 = vadd.f32 0.0, %v561
    %v563 = vpop.f32.mrf.mxu0
    %v564 = vpop.f32.mrf.mxu0
    %v565 = vadd.f32 0.0, %v564
    %v566 = vpop.f32.mrf.mxu0
    %567 = vdwg.mxu0
    %v568 = vpack.c.bf16 %v162, %v161
    %v569 = vpack.c.bf16 %v164, %v163
    %v570 = vpack.c.bf16 %v166, %v165
    %v571 = vpack.c.bf16 %v168, %v167
    %572 = vmatprep.subr.bf16.mxu0 0
    %573 = vmatpush1.bf16.msra.mxu0 0
    %574 = vmatprep.subr.bf16.mxu0 0
    %575 = vmatpush1.bf16.msra.mxu0 0
    %576 = vmatprep.subr.bf16.mxu0 0
    %577 = vmatpush1.bf16.msra.mxu0 0
    %578 = vmatprep.subr.bf16.mxu0 0
    %579 = vmatpush1.bf16.msra.mxu0 0
    %580 = vmatprep.subr.bf16.mxu0 0
    %581 = vmatpush1.bf16.msra.mxu0 %v571
    %582 = vmatprep.subr.bf16.mxu0 0
    %583 = vmatpush1.bf16.msra.mxu0 %v570
    %584 = vmatprep.subr.bf16.mxu0 0
    %585 = vmatpush1.bf16.msra.mxu0 %v569
    %586 = vmatprep.subr.bf16.mxu0 0
    %587 = vmatpush1.bf16.msra.mxu0 %v568
    %588 = vmatprep.subr.bf16.mxu0 0
    %589 = vmatpush2.bf16.msra.mxu0 0
    %590 = vmatprep.subr.bf16.mxu0 0
    %591 = vmatpush2.bf16.msra.mxu0 0
    %592 = vmatprep.subr.bf16.mxu0 0
    %593 = vmatpush2.bf16.msra.mxu0 0
    %594 = vmatprep.subr.bf16.mxu0 0
    %595 = vmatpush2.bf16.msra.mxu0 0
    %596 = vmatprep.subr.bf16.mxu0 0
    %597 = vmatpush2.bf16.msra.mxu0 0
    %598 = vmatprep.subr.bf16.mxu0 0
    %599 = vmatpush2.bf16.msra.mxu0 0
    %600 = vmatprep.subr.bf16.mxu0 0
    %601 = vmatpush2.bf16.msra.mxu0 0
    %602 = vmatprep.subr.bf16.mxu0 0
    %603 = vmatpush2.bf16.msra.mxu0 0
    %604 = vmatprep.mubr.bf16.mxu0 0
    %605 = vmatmul.mubr.bf16.gmra.mxu0 %v198
    %v606 = vpop.f32.mrf.mxu0
    %v607 = vadd.f32 0.0, %v606
    %v608 = vpop.f32.mrf.mxu0
    %v609 = vpop.f32.mrf.mxu0
    %v610 = vadd.f32 0.0, %v609
    %v611 = vpop.f32.mrf.mxu0
    %612 = vmatprep.mubr.bf16.mxu0 0
    %613 = vmatmul.mubr.bf16.gmra.mxu0 %v201
    %v614 = vpop.f32.mrf.mxu0
    %v615 = vadd.f32 0.0, %v614
    %v616 = vpop.f32.mrf.mxu0
    %v617 = vpop.f32.mrf.mxu0
    %v618 = vadd.f32 0.0, %v617
    %v619 = vpop.f32.mrf.mxu0
    %620 = vmatprep.mubr.bf16.mxu0 0
    %621 = vmatmul.mubr.bf16.gmra.mxu0 %v204
    %v622 = vpop.f32.mrf.mxu0
    %v623 = vadd.f32 0.0, %v622
    %v624 = vpop.f32.mrf.mxu0
    %v625 = vpop.f32.mrf.mxu0
    %v626 = vadd.f32 0.0, %v625
    %v627 = vpop.f32.mrf.mxu0
    %628 = vdwg.mxu0
    %v629 = vpack.c.bf16 %v170, %v169
    %v630 = vpack.c.bf16 %v172, %v171
    %v631 = vpack.c.bf16 %v174, %v173
    %v632 = vpack.c.bf16 %v176, %v175
    %633 = vmatprep.subr.bf16.mxu0 0
    %634 = vmatpush1.bf16.msra.mxu0 0
    %635 = vmatprep.subr.bf16.mxu0 0
    %636 = vmatpush1.bf16.msra.mxu0 0
    %637 = vmatprep.subr.bf16.mxu0 0
    %638 = vmatpush1.bf16.msra.mxu0 0
    %639 = vmatprep.subr.bf16.mxu0 0
    %640 = vmatpush1.bf16.msra.mxu0 0
    %641 = vmatprep.subr.bf16.mxu0 0
    %642 = vmatpush1.bf16.msra.mxu0 %v632
    %643 = vmatprep.subr.bf16.mxu0 0
    %644 = vmatpush1.bf16.msra.mxu0 %v631
    %645 = vmatprep.subr.bf16.mxu0 0
    %646 = vmatpush1.bf16.msra.mxu0 %v630
    %647 = vmatprep.subr.bf16.mxu0 0
    %648 = vmatpush1.bf16.msra.mxu0 %v629
    %649 = vmatprep.subr.bf16.mxu0 0
    %650 = vmatpush2.bf16.msra.mxu0 0
    %651 = vmatprep.subr.bf16.mxu0 0
    %652 = vmatpush2.bf16.msra.mxu0 0
    %653 = vmatprep.subr.bf16.mxu0 0
    %654 = vmatpush2.bf16.msra.mxu0 0
    %655 = vmatprep.subr.bf16.mxu0 0
    %656 = vmatpush2.bf16.msra.mxu0 0
    %657 = vmatprep.subr.bf16.mxu0 0
    %658 = vmatpush2.bf16.msra.mxu0 0
    %659 = vmatprep.subr.bf16.mxu0 0
    %660 = vmatpush2.bf16.msra.mxu0 0
    %661 = vmatprep.subr.bf16.mxu0 0
    %662 = vmatpush2.bf16.msra.mxu0 0
    %663 = vmatprep.subr.bf16.mxu0 0
    %664 = vmatpush2.bf16.msra.mxu0 0
    %665 = vmatprep.mubr.bf16.mxu0 0
    %666 = vmatmul.mubr.bf16.gmra.mxu0 %v198
    %v667 = vpop.f32.mrf.mxu0
    %v668 = vadd.f32 0.0, %v667
    %v669 = vpop.f32.mrf.mxu0
    %v670 = vpop.f32.mrf.mxu0
    %v671 = vadd.f32 0.0, %v670
    %v672 = vpop.f32.mrf.mxu0
    %673 = vmatprep.mubr.bf16.mxu0 0
    %674 = vmatmul.mubr.bf16.gmra.mxu0 %v201
    %v675 = vpop.f32.mrf.mxu0
    %v676 = vadd.f32 0.0, %v675
    %v677 = vpop.f32.mrf.mxu0
    %v678 = vpop.f32.mrf.mxu0
    %v679 = vadd.f32 0.0, %v678
    %v680 = vpop.f32.mrf.mxu0
    %681 = vmatprep.mubr.bf16.mxu0 0
    %682 = vmatmul.mubr.bf16.gmra.mxu0 %v204
    %v683 = vpop.f32.mrf.mxu0
    %v684 = vadd.f32 0.0, %v683
    %v685 = vpop.f32.mrf.mxu0
    %v686 = vpop.f32.mrf.mxu0
    %v687 = vadd.f32 0.0, %v686
    %v688 = vpop.f32.mrf.mxu0
    %689 = vdwg.mxu0
    %v690 = vlaneseq
    %v691 = vshrl.u32 %v690, 7
    %v692 = vmul.f32 %v241, %v249
    %v693 = vmul.f32 %v244, %v252
    %vm694 = vcmask 64512
    %v695 = vsel %vm694, %v692, 0.0
    %v696 = vsel %vm694, %v693, 0.0
    %v697 = vadd.f32 %v695, %v696
    %v698 = vrot.slane %v697, 4
    %v699 = vadd.f32 %v697, %v698
    %v700 = vrot.slane %v699, 2
    %v701 = vadd.f32 %v699, %v700
    %v702 = vrot.slane %v701, 1
    %v703 = vadd.f32 %v701, %v702
    %v704 = vmul.f32 %v241, %v310
    %v705 = vmul.f32 %v244, %v313
    %v706 = vsel %vm694, %v704, 0.0
    %v707 = vsel %vm694, %v705, 0.0
    %v708 = vadd.f32 %v706, %v707
    %v709 = vrot.slane %v708, 4
    %v710 = vadd.f32 %v708, %v709
    %v711 = vrot.slane %v710, 2
    %v712 = vadd.f32 %v710, %v711
    %v713 = vrot.slane %v712, 1
    %v714 = vadd.f32 %v712, %v713
    %v715 = vmul.f32 %v241, %v371
    %v716 = vmul.f32 %v244, %v374
    %v717 = vsel %vm694, %v715, 0.0
    %v718 = vsel %vm694, %v716, 0.0
    %v719 = vadd.f32 %v717, %v718
    %v720 = vrot.slane %v719, 4
    %v721 = vadd.f32 %v719, %v720
    %v722 = vrot.slane %v721, 2
    %v723 = vadd.f32 %v721, %v722
    %v724 = vrot.slane %v723, 1
    %v725 = vadd.f32 %v723, %v724
    %v726 = vmul.f32 %v241, %v432
    %v727 = vmul.f32 %v244, %v435
    %v728 = vsel %vm694, %v726, 0.0
    %v729 = vsel %vm694, %v727, 0.0
    %v730 = vadd.f32 %v728, %v729
    %v731 = vrot.slane %v730, 4
    %v732 = vadd.f32 %v730, %v731
    %v733 = vrot.slane %v732, 2
    %v734 = vadd.f32 %v732, %v733
    %v735 = vrot.slane %v734, 1
    %v736 = vadd.f32 %v734, %v735
    %v737 = vmul.f32 %v241, %v493
    %v738 = vmul.f32 %v244, %v496
    %v739 = vsel %vm694, %v737, 0.0
    %v740 = vsel %vm694, %v738, 0.0
    %v741 = vadd.f32 %v739, %v740
    %v742 = vrot.slane %v741, 4
    %v743 = vadd.f32 %v741, %v742
    %v744 = vrot.slane %v743, 2
    %v745 = vadd.f32 %v743, %v744
    %v746 = vrot.slane %v745, 1
    %v747 = vadd.f32 %v745, %v746
    %v748 = vmul.f32 %v241, %v554
    %v749 = vmul.f32 %v244, %v557
    %v750 = vsel %vm694, %v748, 0.0
    %v751 = vsel %vm694, %v749, 0.0
    %v752 = vadd.f32 %v750, %v751
    %v753 = vrot.slane %v752, 4
    %v754 = vadd.f32 %v752, %v753
    %v755 = vrot.slane %v754, 2
    %v756 = vadd.f32 %v754, %v755
    %v757 = vrot.slane %v756, 1
    %v758 = vadd.f32 %v756, %v757
    %v759 = vmul.f32 %v241, %v615
    %v760 = vmul.f32 %v244, %v618
    %v761 = vsel %vm694, %v759, 0.0
    %v762 = vsel %vm694, %v760, 0.0
    %v763 = vadd.f32 %v761, %v762
    %v764 = vrot.slane %v763, 4
    %v765 = vadd.f32 %v763, %v764
    %v766 = vrot.slane %v765, 2
    %v767 = vadd.f32 %v765, %v766
    %v768 = vrot.slane %v767, 1
    %v769 = vadd.f32 %v767, %v768
    %v770 = vmul.f32 %v241, %v676
    %v771 = vmul.f32 %v244, %v679
    %v772 = vsel %vm694, %v770, 0.0
    %v773 = vsel %vm694, %v771, 0.0
    %v774 = vadd.f32 %v772, %v773
    %v775 = vrot.slane %v774, 4
    %v776 = vadd.f32 %v774, %v775
    %v777 = vrot.slane %v776, 2
    %v778 = vadd.f32 %v776, %v777
    %v779 = vrot.slane %v778, 1
    %v780 = vadd.f32 %v778, %v779
    %vm781 = vcmask 1040384
    %v782 = vsel %vm781, %v703, %v714
    %vm783 = vcmask 1041408
    %v784 = vsel %vm783, %v782, %v725
    %vm785 = vcmask 1042432
    %v786 = vsel %vm785, %v784, %v736
    %vm787 = vcmask 1043456
    %v788 = vsel %vm787, %v786, %v747
    %vm789 = vcmask 1044480
    %v790 = vsel %vm789, %v788, %v758
    %vm791 = vcmask 1045504
    %v792 = vsel %vm791, %v790, %v769
    %vm793 = vcmask 1046528
    %v794 = vsel %vm793, %v792, %v780
    %v795 = vmul.f32 %v794, 0.25
    %vm796 = vcmp.le.s32.totalorder %v691, 0
    %v797 = vsel %vm796, 1, 0
    %vm798 = vcmp.eq.s32.totalorder %v797, 1
    %v799 = vsel %vm798, %v795, -inf
    %v800 = vsel %vm694, %v799, -inf
    %v801 = vrot.slane %v800, 4
    %v802 = vmax.f32 %v800, %v801
    %v803 = vrot.slane %v802, 2
    %v804 = vmax.f32 %v802, %v803
    %v805 = vrot.slane %v804, 1
    %v806 = vmax.f32 %v804, %v805
    %v807 = vsub.f32 %v799, %v806
    %v808 = vmul.f32 %v807, 1.442695
    %v809 = vpow.pop %v808
    %v810 = vsel %vm694, %v809, 0.0
    %v811 = vrot.slane %v810, 4
    %v812 = vadd.f32 %v810, %v811
    %v813 = vrot.slane %v812, 2
    %v814 = vadd.f32 %v812, %v813
    %v815 = vrot.slane %v814, 1
    %v816 = vadd.f32 %v814, %v815
    %v817 = vrcp.pop %v816
    %v818 = vmul.f32 %v809, %v817
    %v819 = vlaneseq
    %v820 = vshrl.u32 %v819, 7
    %v821 = vsub.s32 0, %v820
    %v822 = vrot.slane %v818, %v821
    %v823 = vmul.f32 %v822, %v257
    %v824 = vmul.f32 %v822, %v260
    %v825 = vmul.f32 %v302, %v249
    %v826 = vmul.f32 %v305, %v252
    %v827 = vsel %vm694, %v825, 0.0
    %v828 = vsel %vm694, %v826, 0.0
    %v829 = vadd.f32 %v827, %v828
    %v830 = vrot.slane %v829, 4
    %v831 = vadd.f32 %v829, %v830
    %v832 = vrot.slane %v831, 2
    %v833 = vadd.f32 %v831, %v832
    %v834 = vrot.slane %v833, 1
    %v835 = vadd.f32 %v833, %v834
    %v836 = vmul.f32 %v302, %v310
    %v837 = vmul.f32 %v305, %v313
    %v838 = vsel %vm694, %v836, 0.0
    %v839 = vsel %vm694, %v837, 0.0
    %v840 = vadd.f32 %v838, %v839
    %v841 = vrot.slane %v840, 4
    %v842 = vadd.f32 %v840, %v841
    %v843 = vrot.slane %v842, 2
    %v844 = vadd.f32 %v842, %v843
    %v845 = vrot.slane %v844, 1
    %v846 = vadd.f32 %v844, %v845
    %v847 = vmul.f32 %v302, %v371
    %v848 = vmul.f32 %v305, %v374
    %v849 = vsel %vm694, %v847, 0.0
    %v850 = vsel %vm694, %v848, 0.0
    %v851 = vadd.f32 %v849, %v850
    %v852 = vrot.slane %v851, 4
    %v853 = vadd.f32 %v851, %v852
    %v854 = vrot.slane %v853, 2
    %v855 = vadd.f32 %v853, %v854
    %v856 = vrot.slane %v855, 1
    %v857 = vadd.f32 %v855, %v856
    %v858 = vmul.f32 %v302, %v432
    %v859 = vmul.f32 %v305, %v435
    %v860 = vsel %vm694, %v858, 0.0
    %v861 = vsel %vm694, %v859, 0.0
    %v862 = vadd.f32 %v860, %v861
    %v863 = vrot.slane %v862, 4
    %v864 = vadd.f32 %v862, %v863
    %v865 = vrot.slane %v864, 2
    %v866 = vadd.f32 %v864, %v865
    %v867 = vrot.slane %v866, 1
    %v868 = vadd.f32 %v866, %v867
    %v869 = vmul.f32 %v302, %v493
    %v870 = vmul.f32 %v305, %v496
    %v871 = vsel %vm694, %v869, 0.0
    %v872 = vsel %vm694, %v870, 0.0
    %v873 = vadd.f32 %v871, %v872
    %v874 = vrot.slane %v873, 4
    %v875 = vadd.f32 %v873, %v874
    %v876 = vrot.slane %v875, 2
    %v877 = vadd.f32 %v875, %v876
    %v878 = vrot.slane %v877, 1
    %v879 = vadd.f32 %v877, %v878
    %v880 = vmul.f32 %v302, %v554
    %v881 = vmul.f32 %v305, %v557
    %v882 = vsel %vm694, %v880, 0.0
    %v883 = vsel %vm694, %v881, 0.0
    %v884 = vadd.f32 %v882, %v883
    %v885 = vrot.slane %v884, 4
    %v886 = vadd.f32 %v884, %v885
    %v887 = vrot.slane %v886, 2
    %v888 = vadd.f32 %v886, %v887
    %v889 = vrot.slane %v888, 1
    %v890 = vadd.f32 %v888, %v889
    %v891 = vmul.f32 %v302, %v615
    %v892 = vmul.f32 %v305, %v618
    %v893 = vsel %vm694, %v891, 0.0
    %v894 = vsel %vm694, %v892, 0.0
    %v895 = vadd.f32 %v893, %v894
    %v896 = vrot.slane %v895, 4
    %v897 = vadd.f32 %v895, %v896
    %v898 = vrot.slane %v897, 2
    %v899 = vadd.f32 %v897, %v898
    %v900 = vrot.slane %v899, 1
    %v901 = vadd.f32 %v899, %v900
    %v902 = vmul.f32 %v302, %v676
    %v903 = vmul.f32 %v305, %v679
    %v904 = vsel %vm694, %v902, 0.0
    %v905 = vsel %vm694, %v903, 0.0
    %v906 = vadd.f32 %v904, %v905
    %v907 = vrot.slane %v906, 4
    %v908 = vadd.f32 %v906, %v907
    %v909 = vrot.slane %v908, 2
    %v910 = vadd.f32 %v908, %v909
    %v911 = vrot.slane %v910, 1
    %v912 = vadd.f32 %v910, %v911
    %v913 = vsel %vm781, %v835, %v846
    %v914 = vsel %vm783, %v913, %v857
    %v915 = vsel %vm785, %v914, %v868
    %v916 = vsel %vm787, %v915, %v879
    %v917 = vsel %vm789, %v916, %v890
    %v918 = vsel %vm791, %v917, %v901
    %v919 = vsel %vm793, %v918, %v912
    %v920 = vmul.f32 %v919, 0.25
    %vm921 = vcmp.le.s32.totalorder %v691, 1
    %v922 = vsel %vm921, 1, 0
    %vm923 = vcmp.eq.s32.totalorder %v922, 1
    %v924 = vsel %vm923, %v920, -inf
    %v925 = vsel %vm694, %v924, -inf
    %v926 = vrot.slane %v925, 4
    %v927 = vmax.f32 %v925, %v926
    %v928 = vrot.slane %v927, 2
    %v929 = vmax.f32 %v927, %v928
    %v930 = vrot.slane %v929, 1
    %v931 = vmax.f32 %v929, %v930
    %v932 = vsub.f32 %v924, %v931
    %v933 = vmul.f32 %v932, 1.442695
    %v934 = vpow.pop %v933
    %v935 = vsel %vm694, %v934, 0.0
    %v936 = vrot.slane %v935, 4
    %v937 = vadd.f32 %v935, %v936
    %v938 = vrot.slane %v937, 2
    %v939 = vadd.f32 %v937, %v938
    %v940 = vrot.slane %v939, 1
    %v941 = vadd.f32 %v939, %v940
    %v942 = vrcp.pop %v941
    %v943 = vmul.f32 %v934, %v942
    %v944 = vlaneseq
    %v945 = vshrl.u32 %v944, 7
    %v946 = vsub.s32 0, %v945
    %v947 = vrot.slane %v943, %v946
    %v948 = vmul.f32 %v947, %v257
    %v949 = vmul.f32 %v947, %v260
    %v950 = vlaneseq
    %v951 = vshrl.u32 %v950, 7
    %v952 = vsub.s32 1, %v951
    %v953 = vrot.slane %v943, %v952
    %v954 = vmul.f32 %v953, %v318
    %v955 = vmul.f32 %v953, %v321
    %v956 = vadd.f32 %v948, %v954
    %v957 = vadd.f32 %v949, %v955
    %v958 = vmul.f32 %v363, %v249
    %v959 = vmul.f32 %v366, %v252
    %v960 = vsel %vm694, %v958, 0.0
    %v961 = vsel %vm694, %v959, 0.0
    %v962 = vadd.f32 %v960, %v961
    %v963 = vrot.slane %v962, 4
    %v964 = vadd.f32 %v962, %v963
    %v965 = vrot.slane %v964, 2
    %v966 = vadd.f32 %v964, %v965
    %v967 = vrot.slane %v966, 1
    %v968 = vadd.f32 %v966, %v967
    %v969 = vmul.f32 %v363, %v310
    %v970 = vmul.f32 %v366, %v313
    %v971 = vsel %vm694, %v969, 0.0
    %v972 = vsel %vm694, %v970, 0.0
    %v973 = vadd.f32 %v971, %v972
    %v974 = vrot.slane %v973, 4
    %v975 = vadd.f32 %v973, %v974
    %v976 = vrot.slane %v975, 2
    %v977 = vadd.f32 %v975, %v976
    %v978 = vrot.slane %v977, 1
    %v979 = vadd.f32 %v977, %v978
    %v980 = vmul.f32 %v363, %v371
    %v981 = vmul.f32 %v366, %v374
    %v982 = vsel %vm694, %v980, 0.0
    %v983 = vsel %vm694, %v981, 0.0
    %v984 = vadd.f32 %v982, %v983
    %v985 = vrot.slane %v984, 4
    %v986 = vadd.f32 %v984, %v985
    %v987 = vrot.slane %v986, 2
    %v988 = vadd.f32 %v986, %v987
    %v989 = vrot.slane %v988, 1
    %v990 = vadd.f32 %v988, %v989
    %v991 = vmul.f32 %v363, %v432
    %v992 = vmul.f32 %v366, %v435
    %v993 = vsel %vm694, %v991, 0.0
    %v994 = vsel %vm694, %v992, 0.0
    %v995 = vadd.f32 %v993, %v994
    %v996 = vrot.slane %v995, 4
    %v997 = vadd.f32 %v995, %v996
    %v998 = vrot.slane %v997, 2
    %v999 = vadd.f32 %v997, %v998
    %v1000 = vrot.slane %v999, 1
    %v1001 = vadd.f32 %v999, %v1000
    %v1002 = vmul.f32 %v363, %v493
    %v1003 = vmul.f32 %v366, %v496
    %v1004 = vsel %vm694, %v1002, 0.0
    %v1005 = vsel %vm694, %v1003, 0.0
    %v1006 = vadd.f32 %v1004, %v1005
    %v1007 = vrot.slane %v1006, 4
    %v1008 = vadd.f32 %v1006, %v1007
    %v1009 = vrot.slane %v1008, 2
    %v1010 = vadd.f32 %v1008, %v1009
    %v1011 = vrot.slane %v1010, 1
    %v1012 = vadd.f32 %v1010, %v1011
    %v1013 = vmul.f32 %v363, %v554
    %v1014 = vmul.f32 %v366, %v557
    %v1015 = vsel %vm694, %v1013, 0.0
    %v1016 = vsel %vm694, %v1014, 0.0
    %v1017 = vadd.f32 %v1015, %v1016
    %v1018 = vrot.slane %v1017, 4
    %v1019 = vadd.f32 %v1017, %v1018
    %v1020 = vrot.slane %v1019, 2
    %v1021 = vadd.f32 %v1019, %v1020
    %v1022 = vrot.slane %v1021, 1
    %v1023 = vadd.f32 %v1021, %v1022
    %v1024 = vmul.f32 %v363, %v615
    %v1025 = vmul.f32 %v366, %v618
    %v1026 = vsel %vm694, %v1024, 0.0
    %v1027 = vsel %vm694, %v1025, 0.0
    %v1028 = vadd.f32 %v1026, %v1027
    %v1029 = vrot.slane %v1028, 4
    %v1030 = vadd.f32 %v1028, %v1029
    %v1031 = vrot.slane %v1030, 2
    %v1032 = vadd.f32 %v1030, %v1031
    %v1033 = vrot.slane %v1032, 1
    %v1034 = vadd.f32 %v1032, %v1033
    %v1035 = vmul.f32 %v363, %v676
    %v1036 = vmul.f32 %v366, %v679
    %v1037 = vsel %vm694, %v1035, 0.0
    %v1038 = vsel %vm694, %v1036, 0.0
    %v1039 = vadd.f32 %v1037, %v1038
    %v1040 = vrot.slane %v1039, 4
    %v1041 = vadd.f32 %v1039, %v1040
    %v1042 = vrot.slane %v1041, 2
    %v1043 = vadd.f32 %v1041, %v1042
    %v1044 = vrot.slane %v1043, 1
    %v1045 = vadd.f32 %v1043, %v1044
    %v1046 = vsel %vm781, %v968, %v979
    %v1047 = vsel %vm783, %v1046, %v990
    %v1048 = vsel %vm785, %v1047, %v1001
    %v1049 = vsel %vm787, %v1048, %v1012
    %v1050 = vsel %vm789, %v1049, %v1023
    %v1051 = vsel %vm791, %v1050, %v1034
    %v1052 = vsel %vm793, %v1051, %v1045
    %v1053 = vmul.f32 %v1052, 0.25
    %vm1054 = vcmp.le.s32.totalorder %v691, 2
    %v1055 = vsel %vm1054, 1, 0
    %vm1056 = vcmp.eq.s32.totalorder %v1055, 1
    %v1057 = vsel %vm1056, %v1053, -inf
    %v1058 = vsel %vm694, %v1057, -inf
    %v1059 = vrot.slane %v1058, 4
    %v1060 = vmax.f32 %v1058, %v1059
    %v1061 = vrot.slane %v1060, 2
    %v1062 = vmax.f32 %v1060, %v1061
    %v1063 = vrot.slane %v1062, 1
    %v1064 = vmax.f32 %v1062, %v1063
    %v1065 = vsub.f32 %v1057, %v1064
    %v1066 = vmul.f32 %v1065, 1.442695
    %v1067 = vpow.pop %v1066
    %v1068 = vsel %vm694, %v1067, 0.0
    %v1069 = vrot.slane %v1068, 4
    %v1070 = vadd.f32 %v1068, %v1069
    %v1071 = vrot.slane %v1070, 2
    %v1072 = vadd.f32 %v1070, %v1071
    %v1073 = vrot.slane %v1072, 1
    %v1074 = vadd.f32 %v1072, %v1073
    %v1075 = vrcp.pop %v1074
    %v1076 = vmul.f32 %v1067, %v1075
    %v1077 = vlaneseq
    %v1078 = vshrl.u32 %v1077, 7
    %v1079 = vsub.s32 0, %v1078
    %v1080 = vrot.slane %v1076, %v1079
    %v1081 = vmul.f32 %v1080, %v257
    %v1082 = vmul.f32 %v1080, %v260
    %v1083 = vlaneseq
    %v1084 = vshrl.u32 %v1083, 7
    %v1085 = vsub.s32 1, %v1084
    %v1086 = vrot.slane %v1076, %v1085
    %v1087 = vmul.f32 %v1086, %v318
    %v1088 = vmul.f32 %v1086, %v321
    %v1089 = vadd.f32 %v1081, %v1087
    %v1090 = vadd.f32 %v1082, %v1088
    %v1091 = vlaneseq
    %v1092 = vshrl.u32 %v1091, 7
    %v1093 = vsub.s32 2, %v1092
    %v1094 = vrot.slane %v1076, %v1093
    %v1095 = vmul.f32 %v1094, %v379
    %v1096 = vmul.f32 %v1094, %v382
    %v1097 = vadd.f32 %v1089, %v1095
    %v1098 = vadd.f32 %v1090, %v1096
    %v1099 = vmul.f32 %v424, %v249
    %v1100 = vmul.f32 %v427, %v252
    %v1101 = vsel %vm694, %v1099, 0.0
    %v1102 = vsel %vm694, %v1100, 0.0
    %v1103 = vadd.f32 %v1101, %v1102
    %v1104 = vrot.slane %v1103, 4
    %v1105 = vadd.f32 %v1103, %v1104
    %v1106 = vrot.slane %v1105, 2
    %v1107 = vadd.f32 %v1105, %v1106
    %v1108 = vrot.slane %v1107, 1
    %v1109 = vadd.f32 %v1107, %v1108
    %v1110 = vmul.f32 %v424, %v310
    %v1111 = vmul.f32 %v427, %v313
    %v1112 = vsel %vm694, %v1110, 0.0
    %v1113 = vsel %vm694, %v1111, 0.0
    %v1114 = vadd.f32 %v1112, %v1113
    %v1115 = vrot.slane %v1114, 4
    %v1116 = vadd.f32 %v1114, %v1115
    %v1117 = vrot.slane %v1116, 2
    %v1118 = vadd.f32 %v1116, %v1117
    %v1119 = vrot.slane %v1118, 1
    %v1120 = vadd.f32 %v1118, %v1119
    %v1121 = vmul.f32 %v424, %v371
    %v1122 = vmul.f32 %v427, %v374
    %v1123 = vsel %vm694, %v1121, 0.0
    %v1124 = vsel %vm694, %v1122, 0.0
    %v1125 = vadd.f32 %v1123, %v1124
    %v1126 = vrot.slane %v1125, 4
    %v1127 = vadd.f32 %v1125, %v1126
    %v1128 = vrot.slane %v1127, 2
    %v1129 = vadd.f32 %v1127, %v1128
    %v1130 = vrot.slane %v1129, 1
    %v1131 = vadd.f32 %v1129, %v1130
    %v1132 = vmul.f32 %v424, %v432
    %v1133 = vmul.f32 %v427, %v435
    %v1134 = vsel %vm694, %v1132, 0.0
    %v1135 = vsel %vm694, %v1133, 0.0
    %v1136 = vadd.f32 %v1134, %v1135
    %v1137 = vrot.slane %v1136, 4
    %v1138 = vadd.f32 %v1136, %v1137
    %v1139 = vrot.slane %v1138, 2
    %v1140 = vadd.f32 %v1138, %v1139
    %v1141 = vrot.slane %v1140, 1
    %v1142 = vadd.f32 %v1140, %v1141
    %v1143 = vmul.f32 %v424, %v493
    %v1144 = vmul.f32 %v427, %v496
    %v1145 = vsel %vm694, %v1143, 0.0
    %v1146 = vsel %vm694, %v1144, 0.0
    %v1147 = vadd.f32 %v1145, %v1146
    %v1148 = vrot.slane %v1147, 4
    %v1149 = vadd.f32 %v1147, %v1148
    %v1150 = vrot.slane %v1149, 2
    %v1151 = vadd.f32 %v1149, %v1150
    %v1152 = vrot.slane %v1151, 1
    %v1153 = vadd.f32 %v1151, %v1152
    %v1154 = vmul.f32 %v424, %v554
    %v1155 = vmul.f32 %v427, %v557
    %v1156 = vsel %vm694, %v1154, 0.0
    %v1157 = vsel %vm694, %v1155, 0.0
    %v1158 = vadd.f32 %v1156, %v1157
    %v1159 = vrot.slane %v1158, 4
    %v1160 = vadd.f32 %v1158, %v1159
    %v1161 = vrot.slane %v1160, 2
    %v1162 = vadd.f32 %v1160, %v1161
    %v1163 = vrot.slane %v1162, 1
    %v1164 = vadd.f32 %v1162, %v1163
    %v1165 = vmul.f32 %v424, %v615
    %v1166 = vmul.f32 %v427, %v618
    %v1167 = vsel %vm694, %v1165, 0.0
    %v1168 = vsel %vm694, %v1166, 0.0
    %v1169 = vadd.f32 %v1167, %v1168
    %v1170 = vrot.slane %v1169, 4
    %v1171 = vadd.f32 %v1169, %v1170
    %v1172 = vrot.slane %v1171, 2
    %v1173 = vadd.f32 %v1171, %v1172
    %v1174 = vrot.slane %v1173, 1
    %v1175 = vadd.f32 %v1173, %v1174
    %v1176 = vmul.f32 %v424, %v676
    %v1177 = vmul.f32 %v427, %v679
    %v1178 = vsel %vm694, %v1176, 0.0
    %v1179 = vsel %vm694, %v1177, 0.0
    %v1180 = vadd.f32 %v1178, %v1179
    %v1181 = vrot.slane %v1180, 4
    %v1182 = vadd.f32 %v1180, %v1181
    %v1183 = vrot.slane %v1182, 2
    %v1184 = vadd.f32 %v1182, %v1183
    %v1185 = vrot.slane %v1184, 1
    %v1186 = vadd.f32 %v1184, %v1185
    %v1187 = vsel %vm781, %v1109, %v1120
    %v1188 = vsel %vm783, %v1187, %v1131
    %v1189 = vsel %vm785, %v1188, %v1142
    %v1190 = vsel %vm787, %v1189, %v1153
    %v1191 = vsel %vm789, %v1190, %v1164
    %v1192 = vsel %vm791, %v1191, %v1175
    %v1193 = vsel %vm793, %v1192, %v1186
    %v1194 = vmul.f32 %v1193, 0.25
    %vm1195 = vcmp.le.s32.totalorder %v691, 3
    %v1196 = vsel %vm1195, 1, 0
    %vm1197 = vcmp.eq.s32.totalorder %v1196, 1
    %v1198 = vsel %vm1197, %v1194, -inf
    %v1199 = vsel %vm694, %v1198, -inf
    %v1200 = vrot.slane %v1199, 4
    %v1201 = vmax.f32 %v1199, %v1200
    %v1202 = vrot.slane %v1201, 2
    %v1203 = vmax.f32 %v1201, %v1202
    %v1204 = vrot.slane %v1203, 1
    %v1205 = vmax.f32 %v1203, %v1204
    %v1206 = vsub.f32 %v1198, %v1205
    %v1207 = vmul.f32 %v1206, 1.442695
    %v1208 = vpow.pop %v1207
    %v1209 = vsel %vm694, %v1208, 0.0
    %v1210 = vrot.slane %v1209, 4
    %v1211 = vadd.f32 %v1209, %v1210
    %v1212 = vrot.slane %v1211, 2
    %v1213 = vadd.f32 %v1211, %v1212
    %v1214 = vrot.slane %v1213, 1
    %v1215 = vadd.f32 %v1213, %v1214
    %v1216 = vrcp.pop %v1215
    %v1217 = vmul.f32 %v1208, %v1216
    %v1218 = vlaneseq
    %v1219 = vshrl.u32 %v1218, 7
    %v1220 = vsub.s32 0, %v1219
    %v1221 = vrot.slane %v1217, %v1220
    %v1222 = vmul.f32 %v1221, %v257
    %v1223 = vmul.f32 %v1221, %v260
    %v1224 = vlaneseq
    %v1225 = vshrl.u32 %v1224, 7
    %v1226 = vsub.s32 1, %v1225
    %v1227 = vrot.slane %v1217, %v1226
    %v1228 = vmul.f32 %v1227, %v318
    %v1229 = vmul.f32 %v1227, %v321
    %v1230 = vadd.f32 %v1222, %v1228
    %v1231 = vadd.f32 %v1223, %v1229
    %v1232 = vlaneseq
    %v1233 = vshrl.u32 %v1232, 7
    %v1234 = vsub.s32 2, %v1233
    %v1235 = vrot.slane %v1217, %v1234
    %v1236 = vmul.f32 %v1235, %v379
    %v1237 = vmul.f32 %v1235, %v382
    %v1238 = vadd.f32 %v1230, %v1236
    %v1239 = vadd.f32 %v1231, %v1237
    %v1240 = vlaneseq
    %v1241 = vshrl.u32 %v1240, 7
    %v1242 = vsub.s32 3, %v1241
    %v1243 = vrot.slane %v1217, %v1242
    %v1244 = vmul.f32 %v1243, %v440
    %v1245 = vmul.f32 %v1243, %v443
    %v1246 = vadd.f32 %v1238, %v1244
    %v1247 = vadd.f32 %v1239, %v1245
    %v1248 = vmul.f32 %v485, %v249
    %v1249 = vmul.f32 %v488, %v252
    %v1250 = vsel %vm694, %v1248, 0.0
    %v1251 = vsel %vm694, %v1249, 0.0
    %v1252 = vadd.f32 %v1250, %v1251
    %v1253 = vrot.slane %v1252, 4
    %v1254 = vadd.f32 %v1252, %v1253
    %v1255 = vrot.slane %v1254, 2
    %v1256 = vadd.f32 %v1254, %v1255
    %v1257 = vrot.slane %v1256, 1
    %v1258 = vadd.f32 %v1256, %v1257
    %v1259 = vmul.f32 %v485, %v310
    %v1260 = vmul.f32 %v488, %v313
    %v1261 = vsel %vm694, %v1259, 0.0
    %v1262 = vsel %vm694, %v1260, 0.0
    %v1263 = vadd.f32 %v1261, %v1262
    %v1264 = vrot.slane %v1263, 4
    %v1265 = vadd.f32 %v1263, %v1264
    %v1266 = vrot.slane %v1265, 2
    %v1267 = vadd.f32 %v1265, %v1266
    %v1268 = vrot.slane %v1267, 1
    %v1269 = vadd.f32 %v1267, %v1268
    %v1270 = vmul.f32 %v485, %v371
    %v1271 = vmul.f32 %v488, %v374
    %v1272 = vsel %vm694, %v1270, 0.0
    %v1273 = vsel %vm694, %v1271, 0.0
    %v1274 = vadd.f32 %v1272, %v1273
    %v1275 = vrot.slane %v1274, 4
    %v1276 = vadd.f32 %v1274, %v1275
    %v1277 = vrot.slane %v1276, 2
    %v1278 = vadd.f32 %v1276, %v1277
    %v1279 = vrot.slane %v1278, 1
    %v1280 = vadd.f32 %v1278, %v1279
    %v1281 = vmul.f32 %v485, %v432
    %v1282 = vmul.f32 %v488, %v435
    %v1283 = vsel %vm694, %v1281, 0.0
    %v1284 = vsel %vm694, %v1282, 0.0
    %v1285 = vadd.f32 %v1283, %v1284
    %v1286 = vrot.slane %v1285, 4
    %v1287 = vadd.f32 %v1285, %v1286
    %v1288 = vrot.slane %v1287, 2
    %v1289 = vadd.f32 %v1287, %v1288
    %v1290 = vrot.slane %v1289, 1
    %v1291 = vadd.f32 %v1289, %v1290
    %v1292 = vmul.f32 %v485, %v493
    %v1293 = vmul.f32 %v488, %v496
    %v1294 = vsel %vm694, %v1292, 0.0
    %v1295 = vsel %vm694, %v1293, 0.0
    %v1296 = vadd.f32 %v1294, %v1295
    %v1297 = vrot.slane %v1296, 4
    %v1298 = vadd.f32 %v1296, %v1297
    %v1299 = vrot.slane %v1298, 2
    %v1300 = vadd.f32 %v1298, %v1299
    %v1301 = vrot.slane %v1300, 1
    %v1302 = vadd.f32 %v1300, %v1301
    %v1303 = vmul.f32 %v485, %v554
    %v1304 = vmul.f32 %v488, %v557
    %v1305 = vsel %vm694, %v1303, 0.0
    %v1306 = vsel %vm694, %v1304, 0.0
    %v1307 = vadd.f32 %v1305, %v1306
    %v1308 = vrot.slane %v1307, 4
    %v1309 = vadd.f32 %v1307, %v1308
    %v1310 = vrot.slane %v1309, 2
    %v1311 = vadd.f32 %v1309, %v1310
    %v1312 = vrot.slane %v1311, 1
    %v1313 = vadd.f32 %v1311, %v1312
    %v1314 = vmul.f32 %v485, %v615
    %v1315 = vmul.f32 %v488, %v618
    %v1316 = vsel %vm694, %v1314, 0.0
    %v1317 = vsel %vm694, %v1315, 0.0
    %v1318 = vadd.f32 %v1316, %v1317
    %v1319 = vrot.slane %v1318, 4
    %v1320 = vadd.f32 %v1318, %v1319
    %v1321 = vrot.slane %v1320, 2
    %v1322 = vadd.f32 %v1320, %v1321
    %v1323 = vrot.slane %v1322, 1
    %v1324 = vadd.f32 %v1322, %v1323
    %v1325 = vmul.f32 %v485, %v676
    %v1326 = vmul.f32 %v488, %v679
    %v1327 = vsel %vm694, %v1325, 0.0
    %v1328 = vsel %vm694, %v1326, 0.0
    %v1329 = vadd.f32 %v1327, %v1328
    %v1330 = vrot.slane %v1329, 4
    %v1331 = vadd.f32 %v1329, %v1330
    %v1332 = vrot.slane %v1331, 2
    %v1333 = vadd.f32 %v1331, %v1332
    %v1334 = vrot.slane %v1333, 1
    %v1335 = vadd.f32 %v1333, %v1334
    %v1336 = vsel %vm781, %v1258, %v1269
    %v1337 = vsel %vm783, %v1336, %v1280
    %v1338 = vsel %vm785, %v1337, %v1291
    %v1339 = vsel %vm787, %v1338, %v1302
    %v1340 = vsel %vm789, %v1339, %v1313
    %v1341 = vsel %vm791, %v1340, %v1324
    %v1342 = vsel %vm793, %v1341, %v1335
    %v1343 = vmul.f32 %v1342, 0.25
    %vm1344 = vcmp.le.s32.totalorder %v691, 4
    %v1345 = vsel %vm1344, 1, 0
    %vm1346 = vcmp.eq.s32.totalorder %v1345, 1
    %v1347 = vsel %vm1346, %v1343, -inf
    %v1348 = vsel %vm694, %v1347, -inf
    %v1349 = vrot.slane %v1348, 4
    %v1350 = vmax.f32 %v1348, %v1349
    %v1351 = vrot.slane %v1350, 2
    %v1352 = vmax.f32 %v1350, %v1351
    %v1353 = vrot.slane %v1352, 1
    %v1354 = vmax.f32 %v1352, %v1353
    %v1355 = vsub.f32 %v1347, %v1354
    %v1356 = vmul.f32 %v1355, 1.442695
    %v1357 = vpow.pop %v1356
    %v1358 = vsel %vm694, %v1357, 0.0
    %v1359 = vrot.slane %v1358, 4
    %v1360 = vadd.f32 %v1358, %v1359
    %v1361 = vrot.slane %v1360, 2
    %v1362 = vadd.f32 %v1360, %v1361
    %v1363 = vrot.slane %v1362, 1
    %v1364 = vadd.f32 %v1362, %v1363
    %v1365 = vrcp.pop %v1364
    %v1366 = vmul.f32 %v1357, %v1365
    %v1367 = vlaneseq
    %v1368 = vshrl.u32 %v1367, 7
    %v1369 = vsub.s32 0, %v1368
    %v1370 = vrot.slane %v1366, %v1369
    %v1371 = vmul.f32 %v1370, %v257
    %v1372 = vmul.f32 %v1370, %v260
    %v1373 = vlaneseq
    %v1374 = vshrl.u32 %v1373, 7
    %v1375 = vsub.s32 1, %v1374
    %v1376 = vrot.slane %v1366, %v1375
    %v1377 = vmul.f32 %v1376, %v318
    %v1378 = vmul.f32 %v1376, %v321
    %v1379 = vadd.f32 %v1371, %v1377
    %v1380 = vadd.f32 %v1372, %v1378
    %v1381 = vlaneseq
    %v1382 = vshrl.u32 %v1381, 7
    %v1383 = vsub.s32 2, %v1382
    %v1384 = vrot.slane %v1366, %v1383
    %v1385 = vmul.f32 %v1384, %v379
    %v1386 = vmul.f32 %v1384, %v382
    %v1387 = vadd.f32 %v1379, %v1385
    %v1388 = vadd.f32 %v1380, %v1386
    %v1389 = vlaneseq
    %v1390 = vshrl.u32 %v1389, 7
    %v1391 = vsub.s32 3, %v1390
    %v1392 = vrot.slane %v1366, %v1391
    %v1393 = vmul.f32 %v1392, %v440
    %v1394 = vmul.f32 %v1392, %v443
    %v1395 = vadd.f32 %v1387, %v1393
    %v1396 = vadd.f32 %v1388, %v1394
    %v1397 = vlaneseq
    %v1398 = vshrl.u32 %v1397, 7
    %v1399 = vsub.s32 4, %v1398
    %v1400 = vrot.slane %v1366, %v1399
    %v1401 = vmul.f32 %v1400, %v501
    %v1402 = vmul.f32 %v1400, %v504
    %v1403 = vadd.f32 %v1395, %v1401
    %v1404 = vadd.f32 %v1396, %v1402
    %v1405 = vmul.f32 %v546, %v249
    %v1406 = vmul.f32 %v549, %v252
    %v1407 = vsel %vm694, %v1405, 0.0
    %v1408 = vsel %vm694, %v1406, 0.0
    %v1409 = vadd.f32 %v1407, %v1408
    %v1410 = vrot.slane %v1409, 4
    %v1411 = vadd.f32 %v1409, %v1410
    %v1412 = vrot.slane %v1411, 2
    %v1413 = vadd.f32 %v1411, %v1412
    %v1414 = vrot.slane %v1413, 1
    %v1415 = vadd.f32 %v1413, %v1414
    %v1416 = vmul.f32 %v546, %v310
    %v1417 = vmul.f32 %v549, %v313
    %v1418 = vsel %vm694, %v1416, 0.0
    %v1419 = vsel %vm694, %v1417, 0.0
    %v1420 = vadd.f32 %v1418, %v1419
    %v1421 = vrot.slane %v1420, 4
    %v1422 = vadd.f32 %v1420, %v1421
    %v1423 = vrot.slane %v1422, 2
    %v1424 = vadd.f32 %v1422, %v1423
    %v1425 = vrot.slane %v1424, 1
    %v1426 = vadd.f32 %v1424, %v1425
    %v1427 = vmul.f32 %v546, %v371
    %v1428 = vmul.f32 %v549, %v374
    %v1429 = vsel %vm694, %v1427, 0.0
    %v1430 = vsel %vm694, %v1428, 0.0
    %v1431 = vadd.f32 %v1429, %v1430
    %v1432 = vrot.slane %v1431, 4
    %v1433 = vadd.f32 %v1431, %v1432
    %v1434 = vrot.slane %v1433, 2
    %v1435 = vadd.f32 %v1433, %v1434
    %v1436 = vrot.slane %v1435, 1
    %v1437 = vadd.f32 %v1435, %v1436
    %v1438 = vmul.f32 %v546, %v432
    %v1439 = vmul.f32 %v549, %v435
    %v1440 = vsel %vm694, %v1438, 0.0
    %v1441 = vsel %vm694, %v1439, 0.0
    %v1442 = vadd.f32 %v1440, %v1441
    %v1443 = vrot.slane %v1442, 4
    %v1444 = vadd.f32 %v1442, %v1443
    %v1445 = vrot.slane %v1444, 2
    %v1446 = vadd.f32 %v1444, %v1445
    %v1447 = vrot.slane %v1446, 1
    %v1448 = vadd.f32 %v1446, %v1447
    %v1449 = vmul.f32 %v546, %v493
    %v1450 = vmul.f32 %v549, %v496
    %v1451 = vsel %vm694, %v1449, 0.0
    %v1452 = vsel %vm694, %v1450, 0.0
    %v1453 = vadd.f32 %v1451, %v1452
    %v1454 = vrot.slane %v1453, 4
    %v1455 = vadd.f32 %v1453, %v1454
    %v1456 = vrot.slane %v1455, 2
    %v1457 = vadd.f32 %v1455, %v1456
    %v1458 = vrot.slane %v1457, 1
    %v1459 = vadd.f32 %v1457, %v1458
    %v1460 = vmul.f32 %v546, %v554
    %v1461 = vmul.f32 %v549, %v557
    %v1462 = vsel %vm694, %v1460, 0.0
    %v1463 = vsel %vm694, %v1461, 0.0
    %v1464 = vadd.f32 %v1462, %v1463
    %v1465 = vrot.slane %v1464, 4
    %v1466 = vadd.f32 %v1464, %v1465
    %v1467 = vrot.slane %v1466, 2
    %v1468 = vadd.f32 %v1466, %v1467
    %v1469 = vrot.slane %v1468, 1
    %v1470 = vadd.f32 %v1468, %v1469
    %v1471 = vmul.f32 %v546, %v615
    %v1472 = vmul.f32 %v549, %v618
    %v1473 = vsel %vm694, %v1471, 0.0
    %v1474 = vsel %vm694, %v1472, 0.0
    %v1475 = vadd.f32 %v1473, %v1474
    %v1476 = vrot.slane %v1475, 4
    %v1477 = vadd.f32 %v1475, %v1476
    %v1478 = vrot.slane %v1477, 2
    %v1479 = vadd.f32 %v1477, %v1478
    %v1480 = vrot.slane %v1479, 1
    %v1481 = vadd.f32 %v1479, %v1480
    %v1482 = vmul.f32 %v546, %v676
    %v1483 = vmul.f32 %v549, %v679
    %v1484 = vsel %vm694, %v1482, 0.0
    %v1485 = vsel %vm694, %v1483, 0.0
    %v1486 = vadd.f32 %v1484, %v1485
    %v1487 = vrot.slane %v1486, 4
    %v1488 = vadd.f32 %v1486, %v1487
    %v1489 = vrot.slane %v1488, 2
    %v1490 = vadd.f32 %v1488, %v1489
    %v1491 = vrot.slane %v1490, 1
    %v1492 = vadd.f32 %v1490, %v1491
    %v1493 = vsel %vm781, %v1415, %v1426
    %v1494 = vsel %vm783, %v1493, %v1437
    %v1495 = vsel %vm785, %v1494, %v1448
    %v1496 = vsel %vm787, %v1495, %v1459
    %v1497 = vsel %vm789, %v1496, %v1470
    %v1498 = vsel %vm791, %v1497, %v1481
    %v1499 = vsel %vm793, %v1498, %v1492
    %v1500 = vmul.f32 %v1499, 0.25
    %vm1501 = vcmp.le.s32.totalorder %v691, 5
    %v1502 = vsel %vm1501, 1, 0
    %vm1503 = vcmp.eq.s32.totalorder %v1502, 1
    %v1504 = vsel %vm1503, %v1500, -inf
    %v1505 = vsel %vm694, %v1504, -inf
    %v1506 = vrot.slane %v1505, 4
    %v1507 = vmax.f32 %v1505, %v1506
    %v1508 = vrot.slane %v1507, 2
    %v1509 = vmax.f32 %v1507, %v1508
    %v1510 = vrot.slane %v1509, 1
    %v1511 = vmax.f32 %v1509, %v1510
    %v1512 = vsub.f32 %v1504, %v1511
    %v1513 = vmul.f32 %v1512, 1.442695
    %v1514 = vpow.pop %v1513
    %v1515 = vsel %vm694, %v1514, 0.0
    %v1516 = vrot.slane %v1515, 4
    %v1517 = vadd.f32 %v1515, %v1516
    %v1518 = vrot.slane %v1517, 2
    %v1519 = vadd.f32 %v1517, %v1518
    %v1520 = vrot.slane %v1519, 1
    %v1521 = vadd.f32 %v1519, %v1520
    %v1522 = vrcp.pop %v1521
    %v1523 = vmul.f32 %v1514, %v1522
    %v1524 = vlaneseq
    %v1525 = vshrl.u32 %v1524, 7
    %v1526 = vsub.s32 0, %v1525
    %v1527 = vrot.slane %v1523, %v1526
    %v1528 = vmul.f32 %v1527, %v257
    %v1529 = vmul.f32 %v1527, %v260
    %v1530 = vlaneseq
    %v1531 = vshrl.u32 %v1530, 7
    %v1532 = vsub.s32 1, %v1531
    %v1533 = vrot.slane %v1523, %v1532
    %v1534 = vmul.f32 %v1533, %v318
    %v1535 = vmul.f32 %v1533, %v321
    %v1536 = vadd.f32 %v1528, %v1534
    %v1537 = vadd.f32 %v1529, %v1535
    %v1538 = vlaneseq
    %v1539 = vshrl.u32 %v1538, 7
    %v1540 = vsub.s32 2, %v1539
    %v1541 = vrot.slane %v1523, %v1540
    %v1542 = vmul.f32 %v1541, %v379
    %v1543 = vmul.f32 %v1541, %v382
    %v1544 = vadd.f32 %v1536, %v1542
    %v1545 = vadd.f32 %v1537, %v1543
    %v1546 = vlaneseq
    %v1547 = vshrl.u32 %v1546, 7
    %v1548 = vsub.s32 3, %v1547
    %v1549 = vrot.slane %v1523, %v1548
    %v1550 = vmul.f32 %v1549, %v440
    %v1551 = vmul.f32 %v1549, %v443
    %v1552 = vadd.f32 %v1544, %v1550
    %v1553 = vadd.f32 %v1545, %v1551
    %v1554 = vlaneseq
    %v1555 = vshrl.u32 %v1554, 7
    %v1556 = vsub.s32 4, %v1555
    %v1557 = vrot.slane %v1523, %v1556
    %v1558 = vmul.f32 %v1557, %v501
    %v1559 = vmul.f32 %v1557, %v504
    %v1560 = vadd.f32 %v1552, %v1558
    %v1561 = vadd.f32 %v1553, %v1559
    %v1562 = vlaneseq
    %v1563 = vshrl.u32 %v1562, 7
    %v1564 = vsub.s32 5, %v1563
    %v1565 = vrot.slane %v1523, %v1564
    %v1566 = vmul.f32 %v1565, %v562
    %v1567 = vmul.f32 %v1565, %v565
    %v1568 = vadd.f32 %v1560, %v1566
    %v1569 = vadd.f32 %v1561, %v1567
    %v1570 = vmul.f32 %v607, %v249
    %v1571 = vmul.f32 %v610, %v252
    %v1572 = vsel %vm694, %v1570, 0.0
    %v1573 = vsel %vm694, %v1571, 0.0
    %v1574 = vadd.f32 %v1572, %v1573
    %v1575 = vrot.slane %v1574, 4
    %v1576 = vadd.f32 %v1574, %v1575
    %v1577 = vrot.slane %v1576, 2
    %v1578 = vadd.f32 %v1576, %v1577
    %v1579 = vrot.slane %v1578, 1
    %v1580 = vadd.f32 %v1578, %v1579
    %v1581 = vmul.f32 %v607, %v310
    %v1582 = vmul.f32 %v610, %v313
    %v1583 = vsel %vm694, %v1581, 0.0
    %v1584 = vsel %vm694, %v1582, 0.0
    %v1585 = vadd.f32 %v1583, %v1584
    %v1586 = vrot.slane %v1585, 4
    %v1587 = vadd.f32 %v1585, %v1586
    %v1588 = vrot.slane %v1587, 2
    %v1589 = vadd.f32 %v1587, %v1588
    %v1590 = vrot.slane %v1589, 1
    %v1591 = vadd.f32 %v1589, %v1590
    %v1592 = vmul.f32 %v607, %v371
    %v1593 = vmul.f32 %v610, %v374
    %v1594 = vsel %vm694, %v1592, 0.0
    %v1595 = vsel %vm694, %v1593, 0.0
    %v1596 = vadd.f32 %v1594, %v1595
    %v1597 = vrot.slane %v1596, 4
    %v1598 = vadd.f32 %v1596, %v1597
    %v1599 = vrot.slane %v1598, 2
    %v1600 = vadd.f32 %v1598, %v1599
    %v1601 = vrot.slane %v1600, 1
    %v1602 = vadd.f32 %v1600, %v1601
    %v1603 = vmul.f32 %v607, %v432
    %v1604 = vmul.f32 %v610, %v435
    %v1605 = vsel %vm694, %v1603, 0.0
    %v1606 = vsel %vm694, %v1604, 0.0
    %v1607 = vadd.f32 %v1605, %v1606
    %v1608 = vrot.slane %v1607, 4
    %v1609 = vadd.f32 %v1607, %v1608
    %v1610 = vrot.slane %v1609, 2
    %v1611 = vadd.f32 %v1609, %v1610
    %v1612 = vrot.slane %v1611, 1
    %v1613 = vadd.f32 %v1611, %v1612
    %v1614 = vmul.f32 %v607, %v493
    %v1615 = vmul.f32 %v610, %v496
    %v1616 = vsel %vm694, %v1614, 0.0
    %v1617 = vsel %vm694, %v1615, 0.0
    %v1618 = vadd.f32 %v1616, %v1617
    %v1619 = vrot.slane %v1618, 4
    %v1620 = vadd.f32 %v1618, %v1619
    %v1621 = vrot.slane %v1620, 2
    %v1622 = vadd.f32 %v1620, %v1621
    %v1623 = vrot.slane %v1622, 1
    %v1624 = vadd.f32 %v1622, %v1623
    %v1625 = vmul.f32 %v607, %v554
    %v1626 = vmul.f32 %v610, %v557
    %v1627 = vsel %vm694, %v1625, 0.0
    %v1628 = vsel %vm694, %v1626, 0.0
    %v1629 = vadd.f32 %v1627, %v1628
    %v1630 = vrot.slane %v1629, 4
    %v1631 = vadd.f32 %v1629, %v1630
    %v1632 = vrot.slane %v1631, 2
    %v1633 = vadd.f32 %v1631, %v1632
    %v1634 = vrot.slane %v1633, 1
    %v1635 = vadd.f32 %v1633, %v1634
    %v1636 = vmul.f32 %v607, %v615
    %v1637 = vmul.f32 %v610, %v618
    %v1638 = vsel %vm694, %v1636, 0.0
    %v1639 = vsel %vm694, %v1637, 0.0
    %v1640 = vadd.f32 %v1638, %v1639
    %v1641 = vrot.slane %v1640, 4
    %v1642 = vadd.f32 %v1640, %v1641
    %v1643 = vrot.slane %v1642, 2
    %v1644 = vadd.f32 %v1642, %v1643
    %v1645 = vrot.slane %v1644, 1
    %v1646 = vadd.f32 %v1644, %v1645
    %v1647 = vmul.f32 %v607, %v676
    %v1648 = vmul.f32 %v610, %v679
    %v1649 = vsel %vm694, %v1647, 0.0
    %v1650 = vsel %vm694, %v1648, 0.0
    %v1651 = vadd.f32 %v1649, %v1650
    %v1652 = vrot.slane %v1651, 4
    %v1653 = vadd.f32 %v1651, %v1652
    %v1654 = vrot.slane %v1653, 2
    %v1655 = vadd.f32 %v1653, %v1654
    %v1656 = vrot.slane %v1655, 1
    %v1657 = vadd.f32 %v1655, %v1656
    %v1658 = vsel %vm781, %v1580, %v1591
    %v1659 = vsel %vm783, %v1658, %v1602
    %v1660 = vsel %vm785, %v1659, %v1613
    %v1661 = vsel %vm787, %v1660, %v1624
    %v1662 = vsel %vm789, %v1661, %v1635
    %v1663 = vsel %vm791, %v1662, %v1646
    %v1664 = vsel %vm793, %v1663, %v1657
    %v1665 = vmul.f32 %v1664, 0.25
    %vm1666 = vcmp.le.s32.totalorder %v691, 6
    %v1667 = vsel %vm1666, 1, 0
    %vm1668 = vcmp.eq.s32.totalorder %v1667, 1
    %v1669 = vsel %vm1668, %v1665, -inf
    %v1670 = vsel %vm694, %v1669, -inf
    %v1671 = vrot.slane %v1670, 4
    %v1672 = vmax.f32 %v1670, %v1671
    %v1673 = vrot.slane %v1672, 2
    %v1674 = vmax.f32 %v1672, %v1673
    %v1675 = vrot.slane %v1674, 1
    %v1676 = vmax.f32 %v1674, %v1675
    %v1677 = vsub.f32 %v1669, %v1676
    %v1678 = vmul.f32 %v1677, 1.442695
    %v1679 = vpow.pop %v1678
    %v1680 = vsel %vm694, %v1679, 0.0
    %v1681 = vrot.slane %v1680, 4
    %v1682 = vadd.f32 %v1680, %v1681
    %v1683 = vrot.slane %v1682, 2
    %v1684 = vadd.f32 %v1682, %v1683
    %v1685 = vrot.slane %v1684, 1
    %v1686 = vadd.f32 %v1684, %v1685
    %v1687 = vrcp.pop %v1686
    %v1688 = vmul.f32 %v1679, %v1687
    %v1689 = vlaneseq
    %v1690 = vshrl.u32 %v1689, 7
    %v1691 = vsub.s32 0, %v1690
    %v1692 = vrot.slane %v1688, %v1691
    %v1693 = vmul.f32 %v1692, %v257
    %v1694 = vmul.f32 %v1692, %v260
    %v1695 = vlaneseq
    %v1696 = vshrl.u32 %v1695, 7
    %v1697 = vsub.s32 1, %v1696
    %v1698 = vrot.slane %v1688, %v1697
    %v1699 = vmul.f32 %v1698, %v318
    %v1700 = vmul.f32 %v1698, %v321
    %v1701 = vadd.f32 %v1693, %v1699
    %v1702 = vadd.f32 %v1694, %v1700
    %v1703 = vlaneseq
    %v1704 = vshrl.u32 %v1703, 7
    %v1705 = vsub.s32 2, %v1704
    %v1706 = vrot.slane %v1688, %v1705
    %v1707 = vmul.f32 %v1706, %v379
    %v1708 = vmul.f32 %v1706, %v382
    %v1709 = vadd.f32 %v1701, %v1707
    %v1710 = vadd.f32 %v1702, %v1708
    %v1711 = vlaneseq
    %v1712 = vshrl.u32 %v1711, 7
    %v1713 = vsub.s32 3, %v1712
    %v1714 = vrot.slane %v1688, %v1713
    %v1715 = vmul.f32 %v1714, %v440
    %v1716 = vmul.f32 %v1714, %v443
    %v1717 = vadd.f32 %v1709, %v1715
    %v1718 = vadd.f32 %v1710, %v1716
    %v1719 = vlaneseq
    %v1720 = vshrl.u32 %v1719, 7
    %v1721 = vsub.s32 4, %v1720
    %v1722 = vrot.slane %v1688, %v1721
    %v1723 = vmul.f32 %v1722, %v501
    %v1724 = vmul.f32 %v1722, %v504
    %v1725 = vadd.f32 %v1717, %v1723
    %v1726 = vadd.f32 %v1718, %v1724
    %v1727 = vlaneseq
    %v1728 = vshrl.u32 %v1727, 7
    %v1729 = vsub.s32 5, %v1728
    %v1730 = vrot.slane %v1688, %v1729
    %v1731 = vmul.f32 %v1730, %v562
    %v1732 = vmul.f32 %v1730, %v565
    %v1733 = vadd.f32 %v1725, %v1731
    %v1734 = vadd.f32 %v1726, %v1732
    %v1735 = vlaneseq
    %v1736 = vshrl.u32 %v1735, 7
    %v1737 = vsub.s32 6, %v1736
    %v1738 = vrot.slane %v1688, %v1737
    %v1739 = vmul.f32 %v1738, %v623
    %v1740 = vmul.f32 %v1738, %v626
    %v1741 = vadd.f32 %v1733, %v1739
    %v1742 = vadd.f32 %v1734, %v1740
    %v1743 = vmul.f32 %v668, %v249
    %v1744 = vmul.f32 %v671, %v252
    %v1745 = vsel %vm694, %v1743, 0.0
    %v1746 = vsel %vm694, %v1744, 0.0
    %v1747 = vadd.f32 %v1745, %v1746
    %v1748 = vrot.slane %v1747, 4
    %v1749 = vadd.f32 %v1747, %v1748
    %v1750 = vrot.slane %v1749, 2
    %v1751 = vadd.f32 %v1749, %v1750
    %v1752 = vrot.slane %v1751, 1
    %v1753 = vadd.f32 %v1751, %v1752
    %v1754 = vmul.f32 %v668, %v310
    %v1755 = vmul.f32 %v671, %v313
    %v1756 = vsel %vm694, %v1754, 0.0
    %v1757 = vsel %vm694, %v1755, 0.0
    %v1758 = vadd.f32 %v1756, %v1757
    %v1759 = vrot.slane %v1758, 4
    %v1760 = vadd.f32 %v1758, %v1759
    %v1761 = vrot.slane %v1760, 2
    %v1762 = vadd.f32 %v1760, %v1761
    %v1763 = vrot.slane %v1762, 1
    %v1764 = vadd.f32 %v1762, %v1763
    %v1765 = vmul.f32 %v668, %v371
    %v1766 = vmul.f32 %v671, %v374
    %v1767 = vsel %vm694, %v1765, 0.0
    %v1768 = vsel %vm694, %v1766, 0.0
    %v1769 = vadd.f32 %v1767, %v1768
    %v1770 = vrot.slane %v1769, 4
    %v1771 = vadd.f32 %v1769, %v1770
    %v1772 = vrot.slane %v1771, 2
    %v1773 = vadd.f32 %v1771, %v1772
    %v1774 = vrot.slane %v1773, 1
    %v1775 = vadd.f32 %v1773, %v1774
    %v1776 = vmul.f32 %v668, %v432
    %v1777 = vmul.f32 %v671, %v435
    %v1778 = vsel %vm694, %v1776, 0.0
    %v1779 = vsel %vm694, %v1777, 0.0
    %v1780 = vadd.f32 %v1778, %v1779
    %v1781 = vrot.slane %v1780, 4
    %v1782 = vadd.f32 %v1780, %v1781
    %v1783 = vrot.slane %v1782, 2
    %v1784 = vadd.f32 %v1782, %v1783
    %v1785 = vrot.slane %v1784, 1
    %v1786 = vadd.f32 %v1784, %v1785
    %v1787 = vmul.f32 %v668, %v493
    %v1788 = vmul.f32 %v671, %v496
    %v1789 = vsel %vm694, %v1787, 0.0
    %v1790 = vsel %vm694, %v1788, 0.0
    %v1791 = vadd.f32 %v1789, %v1790
    %v1792 = vrot.slane %v1791, 4
    %v1793 = vadd.f32 %v1791, %v1792
    %v1794 = vrot.slane %v1793, 2
    %v1795 = vadd.f32 %v1793, %v1794
    %v1796 = vrot.slane %v1795, 1
    %v1797 = vadd.f32 %v1795, %v1796
    %v1798 = vmul.f32 %v668, %v554
    %v1799 = vmul.f32 %v671, %v557
    %v1800 = vsel %vm694, %v1798, 0.0
    %v1801 = vsel %vm694, %v1799, 0.0
    %v1802 = vadd.f32 %v1800, %v1801
    %v1803 = vrot.slane %v1802, 4
    %v1804 = vadd.f32 %v1802, %v1803
    %v1805 = vrot.slane %v1804, 2
    %v1806 = vadd.f32 %v1804, %v1805
    %v1807 = vrot.slane %v1806, 1
    %v1808 = vadd.f32 %v1806, %v1807
    %v1809 = vmul.f32 %v668, %v615
    %v1810 = vmul.f32 %v671, %v618
    %v1811 = vsel %vm694, %v1809, 0.0
    %v1812 = vsel %vm694, %v1810, 0.0
    %v1813 = vadd.f32 %v1811, %v1812
    %v1814 = vrot.slane %v1813, 4
    %v1815 = vadd.f32 %v1813, %v1814
    %v1816 = vrot.slane %v1815, 2
    %v1817 = vadd.f32 %v1815, %v1816
    %v1818 = vrot.slane %v1817, 1
    %v1819 = vadd.f32 %v1817, %v1818
    %v1820 = vmul.f32 %v668, %v676
    %v1821 = vmul.f32 %v671, %v679
    %v1822 = vsel %vm694, %v1820, 0.0
    %v1823 = vsel %vm694, %v1821, 0.0
    %v1824 = vadd.f32 %v1822, %v1823
    %v1825 = vrot.slane %v1824, 4
    %v1826 = vadd.f32 %v1824, %v1825
    %v1827 = vrot.slane %v1826, 2
    %v1828 = vadd.f32 %v1826, %v1827
    %v1829 = vrot.slane %v1828, 1
    %v1830 = vadd.f32 %v1828, %v1829
    %v1831 = vsel %vm781, %v1753, %v1764
    %v1832 = vsel %vm783, %v1831, %v1775
    %v1833 = vsel %vm785, %v1832, %v1786
    %v1834 = vsel %vm787, %v1833, %v1797
    %v1835 = vsel %vm789, %v1834, %v1808
    %v1836 = vsel %vm791, %v1835, %v1819
    %v1837 = vsel %vm793, %v1836, %v1830
    %v1838 = vmul.f32 %v1837, 0.25
    %vm1839 = vcmp.le.s32.totalorder %v691, 7
    %v1840 = vsel %vm1839, 1, 0
    %vm1841 = vcmp.eq.s32.totalorder %v1840, 1
    %v1842 = vsel %vm1841, %v1838, -inf
    %v1843 = vsel %vm694, %v1842, -inf
    %v1844 = vrot.slane %v1843, 4
    %v1845 = vmax.f32 %v1843, %v1844
    %v1846 = vrot.slane %v1845, 2
    %v1847 = vmax.f32 %v1845, %v1846
    %v1848 = vrot.slane %v1847, 1
    %v1849 = vmax.f32 %v1847, %v1848
    %v1850 = vsub.f32 %v1842, %v1849
    %v1851 = vmul.f32 %v1850, 1.442695
    %v1852 = vpow.pop %v1851
    %v1853 = vsel %vm694, %v1852, 0.0
    %v1854 = vrot.slane %v1853, 4
    %v1855 = vadd.f32 %v1853, %v1854
    %v1856 = vrot.slane %v1855, 2
    %v1857 = vadd.f32 %v1855, %v1856
    %v1858 = vrot.slane %v1857, 1
    %v1859 = vadd.f32 %v1857, %v1858
    %v1860 = vrcp.pop %v1859
    %v1861 = vmul.f32 %v1852, %v1860
    %v1862 = vlaneseq
    %v1863 = vshrl.u32 %v1862, 7
    %v1864 = vsub.s32 0, %v1863
    %v1865 = vrot.slane %v1861, %v1864
    %v1866 = vmul.f32 %v1865, %v257
    %v1867 = vmul.f32 %v1865, %v260
    %v1868 = vlaneseq
    %v1869 = vshrl.u32 %v1868, 7
    %v1870 = vsub.s32 1, %v1869
    %v1871 = vrot.slane %v1861, %v1870
    %v1872 = vmul.f32 %v1871, %v318
    %v1873 = vmul.f32 %v1871, %v321
    %v1874 = vadd.f32 %v1866, %v1872
    %v1875 = vadd.f32 %v1867, %v1873
    %v1876 = vlaneseq
    %v1877 = vshrl.u32 %v1876, 7
    %v1878 = vsub.s32 2, %v1877
    %v1879 = vrot.slane %v1861, %v1878
    %v1880 = vmul.f32 %v1879, %v379
    %v1881 = vmul.f32 %v1879, %v382
    %v1882 = vadd.f32 %v1874, %v1880
    %v1883 = vadd.f32 %v1875, %v1881
    %v1884 = vlaneseq
    %v1885 = vshrl.u32 %v1884, 7
    %v1886 = vsub.s32 3, %v1885
    %v1887 = vrot.slane %v1861, %v1886
    %v1888 = vmul.f32 %v1887, %v440
    %v1889 = vmul.f32 %v1887, %v443
    %v1890 = vadd.f32 %v1882, %v1888
    %v1891 = vadd.f32 %v1883, %v1889
    %v1892 = vlaneseq
    %v1893 = vshrl.u32 %v1892, 7
    %v1894 = vsub.s32 4, %v1893
    %v1895 = vrot.slane %v1861, %v1894
    %v1896 = vmul.f32 %v1895, %v501
    %v1897 = vmul.f32 %v1895, %v504
    %v1898 = vadd.f32 %v1890, %v1896
    %v1899 = vadd.f32 %v1891, %v1897
    %v1900 = vlaneseq
    %v1901 = vshrl.u32 %v1900, 7
    %v1902 = vsub.s32 5, %v1901
    %v1903 = vrot.slane %v1861, %v1902
    %v1904 = vmul.f32 %v1903, %v562
    %v1905 = vmul.f32 %v1903, %v565
    %v1906 = vadd.f32 %v1898, %v1904
    %v1907 = vadd.f32 %v1899, %v1905
    %v1908 = vlaneseq
    %v1909 = vshrl.u32 %v1908, 7
    %v1910 = vsub.s32 6, %v1909
    %v1911 = vrot.slane %v1861, %v1910
    %v1912 = vmul.f32 %v1911, %v623
    %v1913 = vmul.f32 %v1911, %v626
    %v1914 = vadd.f32 %v1906, %v1912
    %v1915 = vadd.f32 %v1907, %v1913
    %v1916 = vlaneseq
    %v1917 = vshrl.u32 %v1916, 7
    %v1918 = vsub.s32 7, %v1917
    %v1919 = vrot.slane %v1861, %v1918
    %v1920 = vmul.f32 %v1919, %v684
    %v1921 = vmul.f32 %v1919, %v687
    %v1922 = vadd.f32 %v1914, %v1920
    %v1923 = vadd.f32 %v1915, %v1921
    %1924 = vxpose.xlu0.b32.start [1/16] %v823, 128
    %1925 = vxpose.xlu0.b32.cont [2/16] %v824, 128
    %1926 = vxpose.xlu0.b32.cont [3/16] %v956, 128
    %1927 = vxpose.xlu0.b32.cont [4/16] %v957, 128
    %1928 = vxpose.xlu0.b32.cont [5/16] %v1097, 128
    %1929 = vxpose.xlu0.b32.cont [6/16] %v1098, 128
    %1930 = vxpose.xlu0.b32.cont [7/16] %v1246, 128
    %1931 = vxpose.xlu0.b32.cont [8/16] %v1247, 128
    %1932 = vxpose.xlu0.b32.cont [9/16] %v1403, 128
    %1933 = vxpose.xlu0.b32.cont [10/16] %v1404, 128
    %1934 = vxpose.xlu0.b32.cont [11/16] %v1568, 128
    %1935 = vxpose.xlu0.b32.cont [12/16] %v1569, 128
    %1936 = vxpose.xlu0.b32.cont [13/16] %v1741, 128
    %1937 = vxpose.xlu0.b32.cont [14/16] %v1742, 128
    %1938 = vxpose.xlu0.b32.cont [15/16] %v1922, 128
    %1939 = vxpose.xlu0.b32.end [16/16] %v1923, 128
    %v1940 = vpop.trf.xlu0
    %v1941 = vpop.trf.xlu0
    %v1942 = vpop.trf.xlu0
    %v1943 = vpop.trf.xlu0
    %v1944 = vpop.trf.xlu0
    %v1945 = vpop.trf.xlu0
    %v1946 = vpop.trf.xlu0
    %v1947 = vpop.trf.xlu0
    %v1948 = vpop.trf.xlu0
    %v1949 = vpop.trf.xlu0
    %v1950 = vpop.trf.xlu0
    %v1951 = vpop.trf.xlu0
    %v1952 = vpop.trf.xlu0
    %v1953 = vpop.trf.xlu0
    %v1954 = vpop.trf.xlu0
    %v1955 = vpop.trf.xlu0
    %1956 = vst [vmem:[#allocation7] sm:$0xff] %v1940
    // Predicated region
    $region18: #{tpu_custom_call.1} parent=1 // pred_check
      _
    $region19: #{tpu_custom_call.1} parent=1 // pred_check_branch
      %1958 = sbr.rel (0) target = $region21
    $region20: #{tpu_custom_call.1} parent=1 // pred_region
      %s1960 = ssub.s32 128, 128
      %1961 = vsyncadd [#allocation4], %s1960
      %s1963 = sshll.u32 [#allocation7], 4
      %s1964 = int_to_ptr.vmem [resolvable:$true] %s1963
      %1966 = dma.vmem_to_hbm [thread:$0]  %s1964, 128, %s2, [#allocation4]
    $region21: #{tpu_custom_call.1} parent=1 // pred_fallthru
      _
    // Predicated region
    $region22: #{tpu_custom_call.1} parent=1 // pred_check
      _
    $region23: #{tpu_custom_call.1} parent=1 // pred_check_branch
      %1968 = sbr.rel (0) target = $region25
    $region24: #{tpu_custom_call.1} parent=1 // pred_region
      %1969 = dma.done [#allocation4], 128
    $region25: #{tpu_custom_call.1} parent=1 // pred_fallthru
      _
    %1970 = vsyncpa [#allocation3], 1
    %1971 = vsyncpa [#allocation6], 1
    %1972 = vsyncpa [#allocation4], 1

</llo_original>
